<compile_context>
chip_gen: v6e
topology: v6e:2x2x1
jax: 0.10.0
libtpu: 0.0.40
codegen_flags: <defaults>
</compile_context>

<pallas_src>
import math
import collections

import numpy as np
import jax
import jax.numpy as jnp
from jax.experimental import pallas as pl
from jax.experimental.pallas import tpu as pltpu

# ----------------------------- model config ---------------------------------
B = 2            # batch
S = 8            # sequence length
V = 32           # vocab size (synthetic)
H = 32           # hidden size
NH = 2           # attention heads
DH = H // NH     # head dim
I = 64           # intermediate (FFN) size
L = 2            # number of encoder layers
BS = B * S
LN_EPS = 1e-12   # BERT LayerNorm eps
ATT_SCALE = 1.0 / math.sqrt(DH)

# ---------------------------- packed-slab layout -----------------------------
W_COLS = 3 * H + H + I               # 192: [wqkv | wo | w1] column widths
W_ROWS = H + I                       # 96: rows 0:H -> wqkv/wo/w1, rows H:H+I -> w2 (cols 0:H)
VEC_W = 3 * H                        # 96-wide rows for the small-vector slab
ROWS_PER_LAYER = 8                   # bqkv, bo, ln1g, ln1b, b1, b2, ln2g, ln2b
QA_OFF = 2 + ROWS_PER_LAYER * L      # after emb LN gain/bias + per-layer rows
WORD_OFF = ((QA_OFF + 2 + 7) // 8) * 8   # word table starts on a sublane boundary
VEC_ROWS = WORD_OFF + V


# ------------------------------ kernel helpers -------------------------------
def _layernorm(x, g, b):
    mu = jnp.mean(x, axis=-1, keepdims=True)
    var = jnp.mean((x - mu) ** 2, axis=-1, keepdims=True)
    return (x - mu) * jax.lax.rsqrt(var + LN_EPS) * g + b


def _ce_row(row, pos):
    # row [1, S] f32; pos scalar i32 clamped to [0, S].
    # pos == S is the HF ignore_index (ignored_index = seq_len) -> zero contribution.
    m = jnp.max(row, axis=-1, keepdims=True)
    lse = m + jnp.log(jnp.sum(jnp.exp(row - m), axis=-1, keepdims=True))
    cols = jax.lax.broadcasted_iota(jnp.int32, row.shape, 1)
    sel = jnp.sum(jnp.where(cols == pos, row, 0.0), axis=-1, keepdims=True)
    valid = (pos < S).astype(jnp.float32)
    return (lse - sel) * valid, valid


# ------------------------------ fused kernel ---------------------------------
def bert_qa_fused_kernel(ids_ref, pos_ref, xmisc_ref, wslab_ref, vecs_ref,
                         loss_ref, qa_ref):
    f32 = jnp.float32

    # ---- embeddings: one-hot word lookup (V=32) + precomputed (type + pos) add ----
    # TODO(synk): for a real 30k vocab, replace the one-hot matmul with an HBM
    # row gather (pl.Element BlockSpec / manual DMA) so the table is not VMEM-resident.
    ids = ids_ref[...]                                              # [BS, 1] i32
    word_oh = (jax.lax.broadcasted_iota(jnp.int32, (BS, V), 1) == ids).astype(f32)
    word_tbl = vecs_ref[WORD_OFF:WORD_OFF + V, 0:H]                 # [V, H]
    word_part = jnp.dot(word_oh, word_tbl, preferred_element_type=f32)
    emb = word_part + xmisc_ref[:, 0:H]                             # + (type + pos) precomputed
    hidden = _layernorm(emb, vecs_ref[0:1, 0:H], vecs_ref[1:2, 0:H])    # [BS, H] f32

    # combined additive attention mask: key padding + block-diagonal cross-batch -1e9
    attn_mask = xmisc_ref[:, H:H + BS]                              # [BS, BS]

    # ---- L encoder layers, fully unrolled; attention batched over B ----
    for l in range(L):
        wl = wslab_ref[l]                                           # [H+I, 192] f32
        base = 2 + ROWS_PER_LAYER * l
        bqkv = vecs_ref[base + 0:base + 1, 0:3 * H]
        bo = vecs_ref[base + 1:base + 2, 0:H]
        ln1g = vecs_ref[base + 2:base + 3, 0:H]
        ln1b = vecs_ref[base + 3:base + 4, 0:H]
        b1 = vecs_ref[base + 4:base + 5, 0:I]
        b2 = vecs_ref[base + 5:base + 6, 0:H]
        ln2g = vecs_ref[base + 6:base + 7, 0:H]
        ln2b = vecs_ref[base + 7:base + 8, 0:H]

        # fused QKV projection (ATT_SCALE pre-folded into the q weights/bias)
        qkv = jnp.dot(hidden, wl[0:H, 0:3 * H], preferred_element_type=f32) + bqkv
        q = qkv[:, 0:H]
        k = qkv[:, H:2 * H]
        v = qkv[:, 2 * H:3 * H]

        heads = []
        for hh in range(NH):
            c0 = hh * DH
            qh = q[:, c0:c0 + DH]                                   # [BS, DH]
            kh = k[:, c0:c0 + DH]
            vh = v[:, c0:c0 + DH]
            s = jnp.dot(qh, kh.T, preferred_element_type=f32) + attn_mask   # [BS, BS]
            # fully-masked rows stay finite: max-subtraction keeps denominator >= 1.
            s = s - jnp.max(s, axis=-1, keepdims=True)
            p = jnp.exp(s)
            p = p * pl.reciprocal(jnp.sum(p, axis=-1, keepdims=True), approx=True)
            heads.append(jnp.dot(p, vh, preferred_element_type=f32))
        ctx = jnp.concatenate(heads, axis=1)                        # [BS, H]

        attn_out = jnp.dot(ctx, wl[0:H, 3 * H:4 * H], preferred_element_type=f32) + bo
        hidden = _layernorm(attn_out + hidden, ln1g, ln1b)

        ff = jnp.dot(hidden, wl[0:H, 4 * H:4 * H + I], preferred_element_type=f32) + b1
        # exact (erf-based) GELU, as in BERT
        ff = 0.5 * ff * (1.0 + jax.lax.erf(ff * (1.0 / math.sqrt(2.0))))
        ff = jnp.dot(ff, wl[H:H + I, 0:H], preferred_element_type=f32) + b2
        hidden = _layernorm(ff + hidden, ln2g, ln2b)

    # ---- QA head: one transpose + one [2,H] @ [H,BS] matmul ----
    qa_wt = vecs_ref[QA_OFF:QA_OFF + 2, 0:H]                        # [2, H]
    qa_b = vecs_ref[QA_OFF:QA_OFF + 2, H:H + 1]                     # [2, 1]
    qa_all = jnp.dot(qa_wt, hidden.T, preferred_element_type=f32) + qa_b    # [2, BS]
    qa_ref[...] = qa_all

    # ---- loss = (CE(start) + CE(end)) / 2 with HF-style ignore_index == S ----
    f32z = jnp.zeros((1, 1), f32)
    s_sum, e_sum, s_cnt, e_cnt = f32z, f32z, f32z, f32z
    for b in range(B):
        srow = qa_all[0:1, b * S:(b + 1) * S]                       # [1, S]
        erow = qa_all[1:2, b * S:(b + 1) * S]
        ce_s, v_s = _ce_row(srow, pos_ref[b])
        ce_e, v_e = _ce_row(erow, pos_ref[B + b])
        s_sum = s_sum + ce_s
        e_sum = e_sum + ce_e
        s_cnt = s_cnt + v_s
        e_cnt = e_cnt + v_e
    loss_ref[...] = 0.5 * (s_sum / jnp.maximum(s_cnt, 1.0)
                           + e_sum / jnp.maximum(e_cnt, 1.0))


# ------------------------------ parameters -----------------------------------
def init_params(key):
    def nrm(key, shape, scale=0.02):
        return scale * jax.random.normal(key, shape, dtype=jnp.float32)

    keys = iter(jax.random.split(key, 64))
    params = {
        "word_emb": nrm(next(keys), (V, H)),
        "pos_emb": nrm(next(keys), (S, H)),
        "type_emb": nrm(next(keys), (2, H)),
        "emb_ln_g": jnp.ones((1, H), jnp.float32),
        "emb_ln_b": jnp.zeros((1, H), jnp.float32),
        "qa_w": nrm(next(keys), (H, 2)),
        "qa_b": jnp.zeros((1, 2), jnp.float32),
        "layers": [],
    }
    for _ in range(L):
        params["layers"].append({
            "wq": nrm(next(keys), (H, H)), "bq": jnp.zeros((1, H), jnp.float32),
            "wk": nrm(next(keys), (H, H)), "bk": jnp.zeros((1, H), jnp.float32),
            "wv": nrm(next(keys), (H, H)), "bv": jnp.zeros((1, H), jnp.float32),
            "wo": nrm(next(keys), (H, H)), "bo": jnp.zeros((1, H), jnp.float32),
            "ln1_g": jnp.ones((1, H), jnp.float32),
            "ln1_b": jnp.zeros((1, H), jnp.float32),
            "w1": nrm(next(keys), (H, I)), "b1": jnp.zeros((1, I), jnp.float32),
            "w2": nrm(next(keys), (I, H)), "b2": jnp.zeros((1, H), jnp.float32),
            "ln2_g": jnp.ones((1, H), jnp.float32),
            "ln2_b": jnp.zeros((1, H), jnp.float32),
        })
    return params


# ------------------------------ forward pass ---------------------------------
def _pad_row(v, width=VEC_W):
    v = v.reshape(1, -1)
    return jnp.pad(v, ((0, 0), (0, width - v.shape[1])))


def seq_supervised_forward(params, input_ids, token_type_ids, attention_mask,
                           start_positions, end_positions):
    layers = params["layers"]
    f32 = jnp.float32

    # ---- pack all weights into ONE matrix slab + ONE small-vector slab ----
    wslab = []
    vec_rows = [_pad_row(params["emb_ln_g"]), _pad_row(params["emb_ln_b"])]
    for lp in layers:
        top = jnp.concatenate([lp["wq"] * ATT_SCALE, lp["wk"], lp["wv"],
                               lp["wo"], lp["w1"]], axis=1)             # [H, 192]
        bot = jnp.pad(lp["w2"], ((0, 0), (0, W_COLS - H)))              # [I, 192]
        wslab.append(jnp.concatenate([top, bot], axis=0))               # [H+I, 192]
        vec_rows += [
            _pad_row(jnp.concatenate([lp["bq"] * ATT_SCALE, lp["bk"], lp["bv"]], axis=1)),
            _pad_row(lp["bo"]), _pad_row(lp["ln1_g"]), _pad_row(lp["ln1_b"]),
            _pad_row(lp["b1"]), _pad_row(lp["b2"]), _pad_row(lp["ln2_g"]), _pad_row(lp["ln2_b"]),
        ]
    wslab = jnp.stack(wslab)                                            # [L, H+I, 192]
    qa_rows = jnp.concatenate([params["qa_w"].T, params["qa_b"].T], axis=1)   # [2, H+1]
    vec_rows += [_pad_row(qa_rows[0:1]), _pad_row(qa_rows[1:2])]
    pad_n = WORD_OFF - (QA_OFF + 2)
    if pad_n:
        vec_rows.append(jnp.zeros((pad_n, VEC_W), f32))
    vec_rows.append(jnp.pad(params["word_emb"], ((0, 0), (0, VEC_W - H))))
    vecs = jnp.concatenate(vec_rows, axis=0)                            # [VEC_ROWS, 96]

    # ---- pack per-example inputs ----
    ids = input_ids.reshape(BS, 1).astype(jnp.int32)
    type_part = params["type_emb"][token_type_ids.reshape(BS)]          # [BS, H]
    pos_part = jnp.tile(params["pos_emb"], (B, 1))                      # [BS, H]
    key_pad = (1.0 - attention_mask.astype(f32)).reshape(BS) * -1e9     # [BS]
    row_b = jnp.arange(BS) // S
    blockdiag = jnp.where(row_b[:, None] == row_b[None, :], 0.0, -1e9)  # [BS, BS]
    xmisc = jnp.concatenate([type_part + pos_part,
                             blockdiag + key_pad[None, :]], axis=1)     # [BS, H+BS]
    # HF clamps to ignored_index = seq_len (== S); pos == S is ignored in the loss.
    sp = jnp.clip(start_positions.reshape(B), 0, S).astype(jnp.int32)
    ep = jnp.clip(end_positions.reshape(B), 0, S).astype(jnp.int32)
    pos = jnp.concatenate([sp, ep])                                     # [2B] SMEM scalars

    vmem = pl.BlockSpec(memory_space=pltpu.MemorySpace.VMEM)
    smem = pl.BlockSpec(memory_space=pltpu.MemorySpace.SMEM)
    loss, qa_all = pl.pallas_call(
        bert_qa_fused_kernel,
        out_shape=(jax.ShapeDtypeStruct((1, 1), f32),
                   jax.ShapeDtypeStruct((2, BS), f32)),
        in_specs=[vmem, smem, vmem, vmem, vmem],
        out_specs=(vmem, vmem),
    )(ids, pos, xmisc, wslab, vecs)
    # TODO(synk): at BERT-base scale, stream the per-layer weight slab over an
    # "arbitrary" length-L grid axis (Buffered(2) / emit_pipeline) instead of keeping
    # all layers resident (v7x 64 MiB VMEM), replace the one-hot word lookup with an
    # HBM row gather, add a "parallel" batch grid axis for v7x's 2 TensorCores, and
    # raise vmem_limit_bytes via CompilerParams on v5e/v6e.
    start_logits = qa_all[0].reshape(B, S)
    end_logits = qa_all[1].reshape(B, S)
    return loss[0, 0], start_logits, end_logits


# ------------------- host-side span decoding (numpy port) --------------------
def make_arg_prediction(batch_start_logits, batch_end_logits, sent_lens):
    _PrelimPrediction = collections.namedtuple(
        'PrelimPrediction', ['start_index', 'end_index', 'start_logit', 'end_logit'])
    batch_start_logits = np.asarray(batch_start_logits)
    batch_end_logits = np.asarray(batch_end_logits)
    predictions = []
    for start_logits, end_logits, length in zip(batch_start_logits,
                                                batch_end_logits, sent_lens):
        prelim_predictions = []
        start_logits, end_logits = start_logits[:length], end_logits[:length]
        bestk_start_inds = sorted(range(1, len(start_logits)),
                                  key=lambda i: start_logits[i])[-20:]
        bestk_end_inds = sorted(range(1, len(end_logits)),
                                key=lambda i: end_logits[i])[-20:]
        for start_index in bestk_start_inds:
            for end_index in bestk_end_inds:
                if start_index > end_index or end_index - start_index > 20:
                    continue
                prelim_predictions.append(_PrelimPrediction(
                    start_index=start_index, end_index=end_index,
                    start_logit=start_logits[start_index],
                    end_logit=end_logits[end_index]))
        if not (0 in bestk_start_inds and 0 in bestk_end_inds):
            prelim_predictions.append(_PrelimPrediction(
                start_index=0, end_index=0,
                start_logit=start_logits[0], end_logit=end_logits[0]))
        prelim_predictions = sorted(prelim_predictions,
                                    key=lambda x: x.start_logit + x.end_logit,
                                    reverse=True)
        predictions.append((prelim_predictions[0].start_index - 1,
                            prelim_predictions[0].end_index - 1))
    return predictions


# ----------------------------------- main ------------------------------------
if __name__ == "__main__":
    key = jax.random.PRNGKey(0)
    k_ids, k_pos, k_params = jax.random.split(key, 3)

    params = init_params(k_params)

    input_ids = jax.random.randint(k_ids, (B, S), 1, V, dtype=jnp.int32)
    attention_mask = jnp.array(
        [[1] * S, [1] * (S - 2) + [0, 0]], dtype=jnp.int32)   # 2nd example padded
    input_ids = input_ids * attention_mask
    token_type_ids = jnp.array(
        [[0, 0, 0, 1, 1, 1, 1, 1], [0, 0, 1, 1, 1, 1, 0, 0]], dtype=jnp.int32)
    start_positions = jax.random.randint(k_pos, (B,), 1, S - 2, dtype=jnp.int32)
    end_positions = jnp.minimum(start_positions + 1, S - 1)

    fwd = jax.jit(seq_supervised_forward)
    loss, start_logits, end_logits = fwd(params, input_ids, token_type_ids,
                                         attention_mask, start_positions,
                                         end_positions)
    jax.block_until_ready((loss, start_logits, end_logits))

    # TODO(synk): original code also slices logits by word_start_mask /
    # word_end_mask (host-side tensor indexing) before decoding; omitted here.
    preds = make_arg_prediction(np.asarray(start_logits),
                                np.asarray(end_logits), [S] * B)
    assert np.isfinite(float(loss))
    assert np.all(np.isfinite(np.asarray(start_logits)))
    assert np.all(np.isfinite(np.asarray(end_logits)))
    assert len(preds) == B
    print("KERNEL_OK")
</pallas_src>

<mosaic_0001>
module attributes {stable_mosaic.version = 11 : i64} {
  func.func @bert_qa_fused_kernel(%arg0: memref<16x1xi32, #tpu.memory_space<vmem>>, %arg1: memref<4xi32, #tpu.memory_space<smem>>, %arg2: memref<16x48xf32, #tpu.memory_space<vmem>>, %arg3: memref<2x96x192xf32, #tpu.memory_space<vmem>>, %arg4: memref<56x96xf32, #tpu.memory_space<vmem>>, %arg5: memref<1x1xf32, #tpu.memory_space<vmem>>, %arg6: memref<2x16xf32, #tpu.memory_space<vmem>>) attributes {dimension_semantics = [], scalar_prefetch = 0 : i64, scratch_operands = 0 : i64, tpu.core_type = #tpu.core_type<tc>} {
    %c0 = arith.constant 0 : index
    %c0_0 = arith.constant 0 : index
    %0 = vector.load %arg0[%c0, %c0_0] : memref<16x1xi32, #tpu.memory_space<vmem>>, vector<16x1xi32>
    %1 = tpu.iota {dimensions = array<i32: 1>} : vector<16x32xi32>
    %2 = vector.broadcast %0 : vector<16x1xi32> to vector<16x32xi32>
    %3 = arith.cmpi eq, %1, %2 : vector<16x32xi32>
    %4 = arith.extui %3 : vector<16x32xi1> to vector<16x32xi32>
    %5 = arith.sitofp %4 : vector<16x32xi32> to vector<16x32xf32>
    %c24 = arith.constant 24 : index
    %c0_1 = arith.constant 0 : index
    %6 = vector.load %arg4[%c24, %c0_1] : memref<56x96xf32, #tpu.memory_space<vmem>>, vector<32x32xf32>
    %cst = arith.constant dense<0.000000e+00> : vector<16x32xf32>
    %7 = tpu.matmul %5, %6, %cst {dimension_numbers = #tpu.dot_dimension_numbers<[1], [0], [0], [1], [0, 0, 1, 1], [], []>} : vector<16x32xf32>, vector<32x32xf32>, vector<16x32xf32> -> vector<16x32xf32>
    %c0_2 = arith.constant 0 : index
    %c0_3 = arith.constant 0 : index
    %8 = vector.load %arg2[%c0_2, %c0_3] : memref<16x48xf32, #tpu.memory_space<vmem>>, vector<16x32xf32>
    %9 = arith.addf %7, %8 : vector<16x32xf32>
    %c0_4 = arith.constant 0 : index
    %c0_5 = arith.constant 0 : index
    %10 = vector.load %arg4[%c0_4, %c0_5] : memref<56x96xf32, #tpu.memory_space<vmem>>, vector<1x32xf32>
    %c1 = arith.constant 1 : index
    %c0_6 = arith.constant 0 : index
    %11 = vector.load %arg4[%c1, %c0_6] : memref<56x96xf32, #tpu.memory_space<vmem>>, vector<1x32xf32>
    %cst_7 = arith.constant dense<0.000000e+00> : vector<16xf32>
    %12 = vector.multi_reduction <add>, %9, %cst_7 [1] : vector<16x32xf32> to vector<16xf32>
    %13 = vector.shape_cast %12 : vector<16xf32> to vector<16x1xf32>
    %cst_8 = arith.constant 3.200000e+01 : f32
    %14 = vector.broadcast %cst_8 : f32 to vector<16x1xf32>
    %15 = arith.divf %13, %14 : vector<16x1xf32>
    %16 = vector.broadcast %15 : vector<16x1xf32> to vector<16x32xf32>
    %17 = arith.subf %9, %16 : vector<16x32xf32>
    %18 = arith.mulf %17, %17 : vector<16x32xf32>
    %cst_9 = arith.constant dense<0.000000e+00> : vector<16xf32>
    %19 = vector.multi_reduction <add>, %18, %cst_9 [1] : vector<16x32xf32> to vector<16xf32>
    %20 = vector.shape_cast %19 : vector<16xf32> to vector<16x1xf32>
    %cst_10 = arith.constant 3.200000e+01 : f32
    %21 = vector.broadcast %cst_10 : f32 to vector<16x1xf32>
    %22 = arith.divf %20, %21 : vector<16x1xf32>
    %23 = vector.broadcast %15 : vector<16x1xf32> to vector<16x32xf32>
    %24 = arith.subf %9, %23 : vector<16x32xf32>
    %cst_11 = arith.constant 9.99999996E-13 : f32
    %25 = vector.broadcast %cst_11 : f32 to vector<16x1xf32>
    %26 = arith.addf %22, %25 : vector<16x1xf32>
    %27 = math.rsqrt %26 : vector<16x1xf32>
    %28 = vector.broadcast %27 : vector<16x1xf32> to vector<16x32xf32>
    %29 = arith.mulf %24, %28 : vector<16x32xf32>
    %30 = vector.broadcast %10 : vector<1x32xf32> to vector<16x32xf32>
    %31 = arith.mulf %29, %30 : vector<16x32xf32>
    %32 = vector.broadcast %11 : vector<1x32xf32> to vector<16x32xf32>
    %33 = arith.addf %31, %32 : vector<16x32xf32>
    %c0_12 = arith.constant 0 : index
    %c32 = arith.constant 32 : index
    %34 = vector.load %arg2[%c0_12, %c32] : memref<16x48xf32, #tpu.memory_space<vmem>>, vector<16x16xf32>
    %c0_13 = arith.constant 0 : index
    %c0_14 = arith.constant 0 : index
    %c0_15 = arith.constant 0 : index
    %35 = vector.load %arg3[%c0_13, %c0_14, %c0_15] : memref<2x96x192xf32, #tpu.memory_space<vmem>>, vector<1x96x192xf32>
    %36 = vector.shape_cast %35 : vector<1x96x192xf32> to vector<96x192xf32>
    %c2 = arith.constant 2 : index
    %c0_16 = arith.constant 0 : index
    %37 = vector.load %arg4[%c2, %c0_16] : memref<56x96xf32, #tpu.memory_space<vmem>>, vector<1x96xf32>
    %c3 = arith.constant 3 : index
    %c0_17 = arith.constant 0 : index
    %38 = vector.load %arg4[%c3, %c0_17] : memref<56x96xf32, #tpu.memory_space<vmem>>, vector<1x32xf32>
    %c4 = arith.constant 4 : index
    %c0_18 = arith.constant 0 : index
    %39 = vector.load %arg4[%c4, %c0_18] : memref<56x96xf32, #tpu.memory_space<vmem>>, vector<1x32xf32>
    %c5 = arith.constant 5 : index
    %c0_19 = arith.constant 0 : index
    %40 = vector.load %arg4[%c5, %c0_19] : memref<56x96xf32, #tpu.memory_space<vmem>>, vector<1x32xf32>
    %c6 = arith.constant 6 : index
    %c0_20 = arith.constant 0 : index
    %41 = vector.load %arg4[%c6, %c0_20] : memref<56x96xf32, #tpu.memory_space<vmem>>, vector<1x64xf32>
    %c7 = arith.constant 7 : index
    %c0_21 = arith.constant 0 : index
    %42 = vector.load %arg4[%c7, %c0_21] : memref<56x96xf32, #tpu.memory_space<vmem>>, vector<1x32xf32>
    %c8 = arith.constant 8 : index
    %c0_22 = arith.constant 0 : index
    %43 = vector.load %arg4[%c8, %c0_22] : memref<56x96xf32, #tpu.memory_space<vmem>>, vector<1x32xf32>
    %c9 = arith.constant 9 : index
    %c0_23 = arith.constant 0 : index
    %44 = vector.load %arg4[%c9, %c0_23] : memref<56x96xf32, #tpu.memory_space<vmem>>, vector<1x32xf32>
    %45 = vector.extract_strided_slice %36 {offsets = [0, 0], sizes = [32, 96], strides = [1, 1]} : vector<96x192xf32> to vector<32x96xf32>
    %cst_24 = arith.constant dense<0.000000e+00> : vector<16x96xf32>
    %46 = tpu.matmul %33, %45, %cst_24 {dimension_numbers = #tpu.dot_dimension_numbers<[1], [0], [0], [1], [0, 0, 1, 1], [], []>} : vector<16x32xf32>, vector<32x96xf32>, vector<16x96xf32> -> vector<16x96xf32>
    %47 = vector.broadcast %37 : vector<1x96xf32> to vector<16x96xf32>
    %48 = arith.addf %46, %47 : vector<16x96xf32>
    %49 = vector.extract_strided_slice %48 {offsets = [0, 0], sizes = [16, 32], strides = [1, 1]} : vector<16x96xf32> to vector<16x32xf32>
    %50 = vector.extract_strided_slice %48 {offsets = [0, 32], sizes = [16, 32], strides = [1, 1]} : vector<16x96xf32> to vector<16x32xf32>
    %51 = vector.extract_strided_slice %48 {offsets = [0, 64], sizes = [16, 32], strides = [1, 1]} : vector<16x96xf32> to vector<16x32xf32>
    %52 = vector.extract_strided_slice %49 {offsets = [0, 0], sizes = [16, 16], strides = [1, 1]} : vector<16x32xf32> to vector<16x16xf32>
    %53 = vector.extract_strided_slice %50 {offsets = [0, 0], sizes = [16, 16], strides = [1, 1]} : vector<16x32xf32> to vector<16x16xf32>
    %54 = vector.extract_strided_slice %51 {offsets = [0, 0], sizes = [16, 16], strides = [1, 1]} : vector<16x32xf32> to vector<16x16xf32>
    %55 = tpu.transpose %53, [1, 0] : vector<16x16xf32> -> vector<16x16xf32>
    %cst_25 = arith.constant dense<0.000000e+00> : vector<16x16xf32>
    %56 = tpu.matmul %52, %55, %cst_25 {dimension_numbers = #tpu.dot_dimension_numbers<[1], [0], [0], [1], [0, 0, 1, 1], [], []>} : vector<16x16xf32>, vector<16x16xf32>, vector<16x16xf32> -> vector<16x16xf32>
    %57 = arith.addf %56, %34 : vector<16x16xf32>
    %cst_26 = arith.constant dense<0xFF800000> : vector<16xf32>
    %58 = vector.multi_reduction <maximumf>, %57, %cst_26 [1] : vector<16x16xf32> to vector<16xf32>
    %59 = vector.shape_cast %58 : vector<16xf32> to vector<16x1xf32>
    %60 = vector.broadcast %59 : vector<16x1xf32> to vector<16x16xf32>
    %61 = arith.subf %57, %60 : vector<16x16xf32>
    %62 = math.exp %61 : vector<16x16xf32>
    %cst_27 = arith.constant dense<0.000000e+00> : vector<16xf32>
    %63 = vector.multi_reduction <add>, %62, %cst_27 [1] : vector<16x16xf32> to vector<16xf32>
    %64 = vector.shape_cast %63 : vector<16xf32> to vector<16x1xf32>
    %65 = tpu.reciprocal %64 {approx = true} : vector<16x1xf32> -> vector<16x1xf32>
    %66 = vector.broadcast %65 : vector<16x1xf32> to vector<16x16xf32>
    %67 = arith.mulf %62, %66 : vector<16x16xf32>
    %cst_28 = arith.constant dense<0.000000e+00> : vector<16x16xf32>
    %68 = tpu.matmul %67, %54, %cst_28 {dimension_numbers = #tpu.dot_dimension_numbers<[1], [0], [0], [1], [0, 0, 1, 1], [], []>} : vector<16x16xf32>, vector<16x16xf32>, vector<16x16xf32> -> vector<16x16xf32>
    %69 = vector.extract_strided_slice %49 {offsets = [0, 16], sizes = [16, 16], strides = [1, 1]} : vector<16x32xf32> to vector<16x16xf32>
    %70 = vector.extract_strided_slice %50 {offsets = [0, 16], sizes = [16, 16], strides = [1, 1]} : vector<16x32xf32> to vector<16x16xf32>
    %71 = vector.extract_strided_slice %51 {offsets = [0, 16], sizes = [16, 16], strides = [1, 1]} : vector<16x32xf32> to vector<16x16xf32>
    %72 = tpu.transpose %70, [1, 0] : vector<16x16xf32> -> vector<16x16xf32>
    %cst_29 = arith.constant dense<0.000000e+00> : vector<16x16xf32>
    %73 = tpu.matmul %69, %72, %cst_29 {dimension_numbers = #tpu.dot_dimension_numbers<[1], [0], [0], [1], [0, 0, 1, 1], [], []>} : vector<16x16xf32>, vector<16x16xf32>, vector<16x16xf32> -> vector<16x16xf32>
    %74 = arith.addf %73, %34 : vector<16x16xf32>
    %cst_30 = arith.constant dense<0xFF800000> : vector<16xf32>
    %75 = vector.multi_reduction <maximumf>, %74, %cst_30 [1] : vector<16x16xf32> to vector<16xf32>
    %76 = vector.shape_cast %75 : vector<16xf32> to vector<16x1xf32>
    %77 = vector.broadcast %76 : vector<16x1xf32> to vector<16x16xf32>
    %78 = arith.subf %74, %77 : vector<16x16xf32>
    %79 = math.exp %78 : vector<16x16xf32>
    %cst_31 = arith.constant dense<0.000000e+00> : vector<16xf32>
    %80 = vector.multi_reduction <add>, %79, %cst_31 [1] : vector<16x16xf32> to vector<16xf32>
    %81 = vector.shape_cast %80 : vector<16xf32> to vector<16x1xf32>
    %82 = tpu.reciprocal %81 {approx = true} : vector<16x1xf32> -> vector<16x1xf32>
    %83 = vector.broadcast %82 : vector<16x1xf32> to vector<16x16xf32>
    %84 = arith.mulf %79, %83 : vector<16x16xf32>
    %cst_32 = arith.constant dense<0.000000e+00> : vector<16x16xf32>
    %85 = tpu.matmul %84, %71, %cst_32 {dimension_numbers = #tpu.dot_dimension_numbers<[1], [0], [0], [1], [0, 0, 1, 1], [], []>} : vector<16x16xf32>, vector<16x16xf32>, vector<16x16xf32> -> vector<16x16xf32>
    %86 = tpu.concatenate %68, %85 in 1 : vector<16x16xf32>, vector<16x16xf32> -> vector<16x32xf32>
    %87 = vector.extract_strided_slice %36 {offsets = [0, 96], sizes = [32, 32], strides = [1, 1]} : vector<96x192xf32> to vector<32x32xf32>
    %cst_33 = arith.constant dense<0.000000e+00> : vector<16x32xf32>
    %88 = tpu.matmul %86, %87, %cst_33 {dimension_numbers = #tpu.dot_dimension_numbers<[1], [0], [0], [1], [0, 0, 1, 1], [], []>} : vector<16x32xf32>, vector<32x32xf32>, vector<16x32xf32> -> vector<16x32xf32>
    %89 = vector.broadcast %38 : vector<1x32xf32> to vector<16x32xf32>
    %90 = arith.addf %88, %89 : vector<16x32xf32>
    %91 = arith.addf %90, %33 : vector<16x32xf32>
    %cst_34 = arith.constant dense<0.000000e+00> : vector<16xf32>
    %92 = vector.multi_reduction <add>, %91, %cst_34 [1] : vector<16x32xf32> to vector<16xf32>
    %93 = vector.shape_cast %92 : vector<16xf32> to vector<16x1xf32>
    %cst_35 = arith.constant 3.200000e+01 : f32
    %94 = vector.broadcast %cst_35 : f32 to vector<16x1xf32>
    %95 = arith.divf %93, %94 : vector<16x1xf32>
    %96 = vector.broadcast %95 : vector<16x1xf32> to vector<16x32xf32>
    %97 = arith.subf %91, %96 : vector<16x32xf32>
    %98 = arith.mulf %97, %97 : vector<16x32xf32>
    %cst_36 = arith.constant dense<0.000000e+00> : vector<16xf32>
    %99 = vector.multi_reduction <add>, %98, %cst_36 [1] : vector<16x32xf32> to vector<16xf32>
    %100 = vector.shape_cast %99 : vector<16xf32> to vector<16x1xf32>
    %cst_37 = arith.constant 3.200000e+01 : f32
    %101 = vector.broadcast %cst_37 : f32 to vector<16x1xf32>
    %102 = arith.divf %100, %101 : vector<16x1xf32>
    %103 = vector.broadcast %95 : vector<16x1xf32> to vector<16x32xf32>
    %104 = arith.subf %91, %103 : vector<16x32xf32>
    %cst_38 = arith.constant 9.99999996E-13 : f32
    %105 = vector.broadcast %cst_38 : f32 to vector<16x1xf32>
    %106 = arith.addf %102, %105 : vector<16x1xf32>
    %107 = math.rsqrt %106 : vector<16x1xf32>
    %108 = vector.broadcast %107 : vector<16x1xf32> to vector<16x32xf32>
    %109 = arith.mulf %104, %108 : vector<16x32xf32>
    %110 = vector.broadcast %39 : vector<1x32xf32> to vector<16x32xf32>
    %111 = arith.mulf %109, %110 : vector<16x32xf32>
    %112 = vector.broadcast %40 : vector<1x32xf32> to vector<16x32xf32>
    %113 = arith.addf %111, %112 : vector<16x32xf32>
    %114 = vector.extract_strided_slice %36 {offsets = [0, 128], sizes = [32, 64], strides = [1, 1]} : vector<96x192xf32> to vector<32x64xf32>
    %cst_39 = arith.constant dense<0.000000e+00> : vector<16x64xf32>
    %115 = tpu.matmul %113, %114, %cst_39 {dimension_numbers = #tpu.dot_dimension_numbers<[1], [0], [0], [1], [0, 0, 1, 1], [], []>} : vector<16x32xf32>, vector<32x64xf32>, vector<16x64xf32> -> vector<16x64xf32>
    %116 = vector.broadcast %41 : vector<1x64xf32> to vector<16x64xf32>
    %117 = arith.addf %115, %116 : vector<16x64xf32>
    %cst_40 = arith.constant 5.000000e-01 : f32
    %118 = vector.broadcast %cst_40 : f32 to vector<16x64xf32>
    %119 = arith.mulf %118, %117 : vector<16x64xf32>
    %cst_41 = arith.constant 0.707106769 : f32
    %120 = vector.broadcast %cst_41 : f32 to vector<16x64xf32>
    %121 = arith.mulf %117, %120 : vector<16x64xf32>
    %122 = math.erf %121 : vector<16x64xf32>
    %cst_42 = arith.constant 1.000000e+00 : f32
    %123 = vector.broadcast %cst_42 : f32 to vector<16x64xf32>
    %124 = arith.addf %123, %122 : vector<16x64xf32>
    %125 = arith.mulf %119, %124 : vector<16x64xf32>
    %126 = vector.extract_strided_slice %36 {offsets = [32, 0], sizes = [64, 32], strides = [1, 1]} : vector<96x192xf32> to vector<64x32xf32>
    %cst_43 = arith.constant dense<0.000000e+00> : vector<16x32xf32>
    %127 = tpu.matmul %125, %126, %cst_43 {dimension_numbers = #tpu.dot_dimension_numbers<[1], [0], [0], [1], [0, 0, 1, 1], [], []>} : vector<16x64xf32>, vector<64x32xf32>, vector<16x32xf32> -> vector<16x32xf32>
    %128 = vector.broadcast %42 : vector<1x32xf32> to vector<16x32xf32>
    %129 = arith.addf %127, %128 : vector<16x32xf32>
    %130 = arith.addf %129, %113 : vector<16x32xf32>
    %cst_44 = arith.constant dense<0.000000e+00> : vector<16xf32>
    %131 = vector.multi_reduction <add>, %130, %cst_44 [1] : vector<16x32xf32> to vector<16xf32>
    %132 = vector.shape_cast %131 : vector<16xf32> to vector<16x1xf32>
    %cst_45 = arith.constant 3.200000e+01 : f32
    %133 = vector.broadcast %cst_45 : f32 to vector<16x1xf32>
    %134 = arith.divf %132, %133 : vector<16x1xf32>
    %135 = vector.broadcast %134 : vector<16x1xf32> to vector<16x32xf32>
    %136 = arith.subf %130, %135 : vector<16x32xf32>
    %137 = arith.mulf %136, %136 : vector<16x32xf32>
    %cst_46 = arith.constant dense<0.000000e+00> : vector<16xf32>
    %138 = vector.multi_reduction <add>, %137, %cst_46 [1] : vector<16x32xf32> to vector<16xf32>
    %139 = vector.shape_cast %138 : vector<16xf32> to vector<16x1xf32>
    %cst_47 = arith.constant 3.200000e+01 : f32
    %140 = vector.broadcast %cst_47 : f32 to vector<16x1xf32>
    %141 = arith.divf %139, %140 : vector<16x1xf32>
    %142 = vector.broadcast %134 : vector<16x1xf32> to vector<16x32xf32>
    %143 = arith.subf %130, %142 : vector<16x32xf32>
    %cst_48 = arith.constant 9.99999996E-13 : f32
    %144 = vector.broadcast %cst_48 : f32 to vector<16x1xf32>
    %145 = arith.addf %141, %144 : vector<16x1xf32>
    %146 = math.rsqrt %145 : vector<16x1xf32>
    %147 = vector.broadcast %146 : vector<16x1xf32> to vector<16x32xf32>
    %148 = arith.mulf %143, %147 : vector<16x32xf32>
    %149 = vector.broadcast %43 : vector<1x32xf32> to vector<16x32xf32>
    %150 = arith.mulf %148, %149 : vector<16x32xf32>
    %151 = vector.broadcast %44 : vector<1x32xf32> to vector<16x32xf32>
    %152 = arith.addf %150, %151 : vector<16x32xf32>
    %c1_49 = arith.constant 1 : index
    %c0_50 = arith.constant 0 : index
    %c0_51 = arith.constant 0 : index
    %153 = vector.load %arg3[%c1_49, %c0_50, %c0_51] : memref<2x96x192xf32, #tpu.memory_space<vmem>>, vector<1x96x192xf32>
    %154 = vector.shape_cast %153 : vector<1x96x192xf32> to vector<96x192xf32>
    %c10 = arith.constant 10 : index
    %c0_52 = arith.constant 0 : index
    %155 = vector.load %arg4[%c10, %c0_52] : memref<56x96xf32, #tpu.memory_space<vmem>>, vector<1x96xf32>
    %c11 = arith.constant 11 : index
    %c0_53 = arith.constant 0 : index
    %156 = vector.load %arg4[%c11, %c0_53] : memref<56x96xf32, #tpu.memory_space<vmem>>, vector<1x32xf32>
    %c12 = arith.constant 12 : index
    %c0_54 = arith.constant 0 : index
    %157 = vector.load %arg4[%c12, %c0_54] : memref<56x96xf32, #tpu.memory_space<vmem>>, vector<1x32xf32>
    %c13 = arith.constant 13 : index
    %c0_55 = arith.constant 0 : index
    %158 = vector.load %arg4[%c13, %c0_55] : memref<56x96xf32, #tpu.memory_space<vmem>>, vector<1x32xf32>
    %c14 = arith.constant 14 : index
    %c0_56 = arith.constant 0 : index
    %159 = vector.load %arg4[%c14, %c0_56] : memref<56x96xf32, #tpu.memory_space<vmem>>, vector<1x64xf32>
    %c15 = arith.constant 15 : index
    %c0_57 = arith.constant 0 : index
    %160 = vector.load %arg4[%c15, %c0_57] : memref<56x96xf32, #tpu.memory_space<vmem>>, vector<1x32xf32>
    %c16 = arith.constant 16 : index
    %c0_58 = arith.constant 0 : index
    %161 = vector.load %arg4[%c16, %c0_58] : memref<56x96xf32, #tpu.memory_space<vmem>>, vector<1x32xf32>
    %c17 = arith.constant 17 : index
    %c0_59 = arith.constant 0 : index
    %162 = vector.load %arg4[%c17, %c0_59] : memref<56x96xf32, #tpu.memory_space<vmem>>, vector<1x32xf32>
    %163 = vector.extract_strided_slice %154 {offsets = [0, 0], sizes = [32, 96], strides = [1, 1]} : vector<96x192xf32> to vector<32x96xf32>
    %cst_60 = arith.constant dense<0.000000e+00> : vector<16x96xf32>
    %164 = tpu.matmul %152, %163, %cst_60 {dimension_numbers = #tpu.dot_dimension_numbers<[1], [0], [0], [1], [0, 0, 1, 1], [], []>} : vector<16x32xf32>, vector<32x96xf32>, vector<16x96xf32> -> vector<16x96xf32>
    %165 = vector.broadcast %155 : vector<1x96xf32> to vector<16x96xf32>
    %166 = arith.addf %164, %165 : vector<16x96xf32>
    %167 = vector.extract_strided_slice %166 {offsets = [0, 0], sizes = [16, 32], strides = [1, 1]} : vector<16x96xf32> to vector<16x32xf32>
    %168 = vector.extract_strided_slice %166 {offsets = [0, 32], sizes = [16, 32], strides = [1, 1]} : vector<16x96xf32> to vector<16x32xf32>
    %169 = vector.extract_strided_slice %166 {offsets = [0, 64], sizes = [16, 32], strides = [1, 1]} : vector<16x96xf32> to vector<16x32xf32>
    %170 = vector.extract_strided_slice %167 {offsets = [0, 0], sizes = [16, 16], strides = [1, 1]} : vector<16x32xf32> to vector<16x16xf32>
    %171 = vector.extract_strided_slice %168 {offsets = [0, 0], sizes = [16, 16], strides = [1, 1]} : vector<16x32xf32> to vector<16x16xf32>
    %172 = vector.extract_strided_slice %169 {offsets = [0, 0], sizes = [16, 16], strides = [1, 1]} : vector<16x32xf32> to vector<16x16xf32>
    %173 = tpu.transpose %171, [1, 0] : vector<16x16xf32> -> vector<16x16xf32>
    %cst_61 = arith.constant dense<0.000000e+00> : vector<16x16xf32>
    %174 = tpu.matmul %170, %173, %cst_61 {dimension_numbers = #tpu.dot_dimension_numbers<[1], [0], [0], [1], [0, 0, 1, 1], [], []>} : vector<16x16xf32>, vector<16x16xf32>, vector<16x16xf32> -> vector<16x16xf32>
    %175 = arith.addf %174, %34 : vector<16x16xf32>
    %cst_62 = arith.constant dense<0xFF800000> : vector<16xf32>
    %176 = vector.multi_reduction <maximumf>, %175, %cst_62 [1] : vector<16x16xf32> to vector<16xf32>
    %177 = vector.shape_cast %176 : vector<16xf32> to vector<16x1xf32>
    %178 = vector.broadcast %177 : vector<16x1xf32> to vector<16x16xf32>
    %179 = arith.subf %175, %178 : vector<16x16xf32>
    %180 = math.exp %179 : vector<16x16xf32>
    %cst_63 = arith.constant dense<0.000000e+00> : vector<16xf32>
    %181 = vector.multi_reduction <add>, %180, %cst_63 [1] : vector<16x16xf32> to vector<16xf32>
    %182 = vector.shape_cast %181 : vector<16xf32> to vector<16x1xf32>
    %183 = tpu.reciprocal %182 {approx = true} : vector<16x1xf32> -> vector<16x1xf32>
    %184 = vector.broadcast %183 : vector<16x1xf32> to vector<16x16xf32>
    %185 = arith.mulf %180, %184 : vector<16x16xf32>
    %cst_64 = arith.constant dense<0.000000e+00> : vector<16x16xf32>
    %186 = tpu.matmul %185, %172, %cst_64 {dimension_numbers = #tpu.dot_dimension_numbers<[1], [0], [0], [1], [0, 0, 1, 1], [], []>} : vector<16x16xf32>, vector<16x16xf32>, vector<16x16xf32> -> vector<16x16xf32>
    %187 = vector.extract_strided_slice %167 {offsets = [0, 16], sizes = [16, 16], strides = [1, 1]} : vector<16x32xf32> to vector<16x16xf32>
    %188 = vector.extract_strided_slice %168 {offsets = [0, 16], sizes = [16, 16], strides = [1, 1]} : vector<16x32xf32> to vector<16x16xf32>
    %189 = vector.extract_strided_slice %169 {offsets = [0, 16], sizes = [16, 16], strides = [1, 1]} : vector<16x32xf32> to vector<16x16xf32>
    %190 = tpu.transpose %188, [1, 0] : vector<16x16xf32> -> vector<16x16xf32>
    %cst_65 = arith.constant dense<0.000000e+00> : vector<16x16xf32>
    %191 = tpu.matmul %187, %190, %cst_65 {dimension_numbers = #tpu.dot_dimension_numbers<[1], [0], [0], [1], [0, 0, 1, 1], [], []>} : vector<16x16xf32>, vector<16x16xf32>, vector<16x16xf32> -> vector<16x16xf32>
    %192 = arith.addf %191, %34 : vector<16x16xf32>
    %cst_66 = arith.constant dense<0xFF800000> : vector<16xf32>
    %193 = vector.multi_reduction <maximumf>, %192, %cst_66 [1] : vector<16x16xf32> to vector<16xf32>
    %194 = vector.shape_cast %193 : vector<16xf32> to vector<16x1xf32>
    %195 = vector.broadcast %194 : vector<16x1xf32> to vector<16x16xf32>
    %196 = arith.subf %192, %195 : vector<16x16xf32>
    %197 = math.exp %196 : vector<16x16xf32>
    %cst_67 = arith.constant dense<0.000000e+00> : vector<16xf32>
    %198 = vector.multi_reduction <add>, %197, %cst_67 [1] : vector<16x16xf32> to vector<16xf32>
    %199 = vector.shape_cast %198 : vector<16xf32> to vector<16x1xf32>
    %200 = tpu.reciprocal %199 {approx = true} : vector<16x1xf32> -> vector<16x1xf32>
    %201 = vector.broadcast %200 : vector<16x1xf32> to vector<16x16xf32>
    %202 = arith.mulf %197, %201 : vector<16x16xf32>
    %cst_68 = arith.constant dense<0.000000e+00> : vector<16x16xf32>
    %203 = tpu.matmul %202, %189, %cst_68 {dimension_numbers = #tpu.dot_dimension_numbers<[1], [0], [0], [1], [0, 0, 1, 1], [], []>} : vector<16x16xf32>, vector<16x16xf32>, vector<16x16xf32> -> vector<16x16xf32>
    %204 = tpu.concatenate %186, %203 in 1 : vector<16x16xf32>, vector<16x16xf32> -> vector<16x32xf32>
    %205 = vector.extract_strided_slice %154 {offsets = [0, 96], sizes = [32, 32], strides = [1, 1]} : vector<96x192xf32> to vector<32x32xf32>
    %cst_69 = arith.constant dense<0.000000e+00> : vector<16x32xf32>
    %206 = tpu.matmul %204, %205, %cst_69 {dimension_numbers = #tpu.dot_dimension_numbers<[1], [0], [0], [1], [0, 0, 1, 1], [], []>} : vector<16x32xf32>, vector<32x32xf32>, vector<16x32xf32> -> vector<16x32xf32>
    %207 = vector.broadcast %156 : vector<1x32xf32> to vector<16x32xf32>
    %208 = arith.addf %206, %207 : vector<16x32xf32>
    %209 = arith.addf %208, %152 : vector<16x32xf32>
    %cst_70 = arith.constant dense<0.000000e+00> : vector<16xf32>
    %210 = vector.multi_reduction <add>, %209, %cst_70 [1] : vector<16x32xf32> to vector<16xf32>
    %211 = vector.shape_cast %210 : vector<16xf32> to vector<16x1xf32>
    %cst_71 = arith.constant 3.200000e+01 : f32
    %212 = vector.broadcast %cst_71 : f32 to vector<16x1xf32>
    %213 = arith.divf %211, %212 : vector<16x1xf32>
    %214 = vector.broadcast %213 : vector<16x1xf32> to vector<16x32xf32>
    %215 = arith.subf %209, %214 : vector<16x32xf32>
    %216 = arith.mulf %215, %215 : vector<16x32xf32>
    %cst_72 = arith.constant dense<0.000000e+00> : vector<16xf32>
    %217 = vector.multi_reduction <add>, %216, %cst_72 [1] : vector<16x32xf32> to vector<16xf32>
    %218 = vector.shape_cast %217 : vector<16xf32> to vector<16x1xf32>
    %cst_73 = arith.constant 3.200000e+01 : f32
    %219 = vector.broadcast %cst_73 : f32 to vector<16x1xf32>
    %220 = arith.divf %218, %219 : vector<16x1xf32>
    %221 = vector.broadcast %213 : vector<16x1xf32> to vector<16x32xf32>
    %222 = arith.subf %209, %221 : vector<16x32xf32>
    %cst_74 = arith.constant 9.99999996E-13 : f32
    %223 = vector.broadcast %cst_74 : f32 to vector<16x1xf32>
    %224 = arith.addf %220, %223 : vector<16x1xf32>
    %225 = math.rsqrt %224 : vector<16x1xf32>
    %226 = vector.broadcast %225 : vector<16x1xf32> to vector<16x32xf32>
    %227 = arith.mulf %222, %226 : vector<16x32xf32>
    %228 = vector.broadcast %157 : vector<1x32xf32> to vector<16x32xf32>
    %229 = arith.mulf %227, %228 : vector<16x32xf32>
    %230 = vector.broadcast %158 : vector<1x32xf32> to vector<16x32xf32>
    %231 = arith.addf %229, %230 : vector<16x32xf32>
    %232 = vector.extract_strided_slice %154 {offsets = [0, 128], sizes = [32, 64], strides = [1, 1]} : vector<96x192xf32> to vector<32x64xf32>
    %cst_75 = arith.constant dense<0.000000e+00> : vector<16x64xf32>
    %233 = tpu.matmul %231, %232, %cst_75 {dimension_numbers = #tpu.dot_dimension_numbers<[1], [0], [0], [1], [0, 0, 1, 1], [], []>} : vector<16x32xf32>, vector<32x64xf32>, vector<16x64xf32> -> vector<16x64xf32>
    %234 = vector.broadcast %159 : vector<1x64xf32> to vector<16x64xf32>
    %235 = arith.addf %233, %234 : vector<16x64xf32>
    %cst_76 = arith.constant 5.000000e-01 : f32
    %236 = vector.broadcast %cst_76 : f32 to vector<16x64xf32>
    %237 = arith.mulf %236, %235 : vector<16x64xf32>
    %cst_77 = arith.constant 0.707106769 : f32
    %238 = vector.broadcast %cst_77 : f32 to vector<16x64xf32>
    %239 = arith.mulf %235, %238 : vector<16x64xf32>
    %240 = math.erf %239 : vector<16x64xf32>
    %cst_78 = arith.constant 1.000000e+00 : f32
    %241 = vector.broadcast %cst_78 : f32 to vector<16x64xf32>
    %242 = arith.addf %241, %240 : vector<16x64xf32>
    %243 = arith.mulf %237, %242 : vector<16x64xf32>
    %244 = vector.extract_strided_slice %154 {offsets = [32, 0], sizes = [64, 32], strides = [1, 1]} : vector<96x192xf32> to vector<64x32xf32>
    %cst_79 = arith.constant dense<0.000000e+00> : vector<16x32xf32>
    %245 = tpu.matmul %243, %244, %cst_79 {dimension_numbers = #tpu.dot_dimension_numbers<[1], [0], [0], [1], [0, 0, 1, 1], [], []>} : vector<16x64xf32>, vector<64x32xf32>, vector<16x32xf32> -> vector<16x32xf32>
    %246 = vector.broadcast %160 : vector<1x32xf32> to vector<16x32xf32>
    %247 = arith.addf %245, %246 : vector<16x32xf32>
    %248 = arith.addf %247, %231 : vector<16x32xf32>
    %cst_80 = arith.constant dense<0.000000e+00> : vector<16xf32>
    %249 = vector.multi_reduction <add>, %248, %cst_80 [1] : vector<16x32xf32> to vector<16xf32>
    %250 = vector.shape_cast %249 : vector<16xf32> to vector<16x1xf32>
    %cst_81 = arith.constant 3.200000e+01 : f32
    %251 = vector.broadcast %cst_81 : f32 to vector<16x1xf32>
    %252 = arith.divf %250, %251 : vector<16x1xf32>
    %253 = vector.broadcast %252 : vector<16x1xf32> to vector<16x32xf32>
    %254 = arith.subf %248, %253 : vector<16x32xf32>
    %255 = arith.mulf %254, %254 : vector<16x32xf32>
    %cst_82 = arith.constant dense<0.000000e+00> : vector<16xf32>
    %256 = vector.multi_reduction <add>, %255, %cst_82 [1] : vector<16x32xf32> to vector<16xf32>
    %257 = vector.shape_cast %256 : vector<16xf32> to vector<16x1xf32>
    %cst_83 = arith.constant 3.200000e+01 : f32
    %258 = vector.broadcast %cst_83 : f32 to vector<16x1xf32>
    %259 = arith.divf %257, %258 : vector<16x1xf32>
    %260 = vector.broadcast %252 : vector<16x1xf32> to vector<16x32xf32>
    %261 = arith.subf %248, %260 : vector<16x32xf32>
    %cst_84 = arith.constant 9.99999996E-13 : f32
    %262 = vector.broadcast %cst_84 : f32 to vector<16x1xf32>
    %263 = arith.addf %259, %262 : vector<16x1xf32>
    %264 = math.rsqrt %263 : vector<16x1xf32>
    %265 = vector.broadcast %264 : vector<16x1xf32> to vector<16x32xf32>
    %266 = arith.mulf %261, %265 : vector<16x32xf32>
    %267 = vector.broadcast %161 : vector<1x32xf32> to vector<16x32xf32>
    %268 = arith.mulf %266, %267 : vector<16x32xf32>
    %269 = vector.broadcast %162 : vector<1x32xf32> to vector<16x32xf32>
    %270 = arith.addf %268, %269 : vector<16x32xf32>
    %c18 = arith.constant 18 : index
    %c0_85 = arith.constant 0 : index
    %271 = vector.load %arg4[%c18, %c0_85] : memref<56x96xf32, #tpu.memory_space<vmem>>, vector<2x32xf32>
    %c18_86 = arith.constant 18 : index
    %c32_87 = arith.constant 32 : index
    %272 = vector.load %arg4[%c18_86, %c32_87] : memref<56x96xf32, #tpu.memory_space<vmem>>, vector<2x1xf32>
    %273 = tpu.transpose %270, [1, 0] : vector<16x32xf32> -> vector<32x16xf32>
    %cst_88 = arith.constant dense<0.000000e+00> : vector<2x16xf32>
    %274 = tpu.matmul %271, %273, %cst_88 {dimension_numbers = #tpu.dot_dimension_numbers<[1], [0], [0], [1], [0, 0, 1, 1], [], []>} : vector<2x32xf32>, vector<32x16xf32>, vector<2x16xf32> -> vector<2x16xf32>
    %275 = vector.broadcast %272 : vector<2x1xf32> to vector<2x16xf32>
    %276 = arith.addf %274, %275 : vector<2x16xf32>
    %c0_89 = arith.constant 0 : index
    %c0_90 = arith.constant 0 : index
    %277 = vector.load %arg6[%c0_89, %c0_90] : memref<2x16xf32, #tpu.memory_space<vmem>>, vector<2x16xf32>
    tpu.vector_store %arg6[%c0_89, %c0_90], %276 {strides = array<i32>} : memref<2x16xf32, #tpu.memory_space<vmem>>, vector<2x16xf32>,
    %cst_91 = arith.constant 0.000000e+00 : f32
    %278 = vector.broadcast %cst_91 : f32 to vector<1x1xf32>
    %279 = vector.extract_strided_slice %276 {offsets = [0, 0], sizes = [1, 8], strides = [1, 1]} : vector<2x16xf32> to vector<1x8xf32>
    %280 = vector.extract_strided_slice %276 {offsets = [1, 0], sizes = [1, 8], strides = [1, 1]} : vector<2x16xf32> to vector<1x8xf32>
    %c0_92 = arith.constant 0 : index
    %281 = memref.load %arg1[%c0_92] : memref<4xi32, #tpu.memory_space<smem>>
    %cst_93 = arith.constant dense<0xFF800000> : vector<1xf32>
    %282 = vector.multi_reduction <maximumf>, %279, %cst_93 [1] : vector<1x8xf32> to vector<1xf32>
    %283 = vector.shape_cast %282 : vector<1xf32> to vector<1x1xf32>
    %284 = vector.broadcast %283 : vector<1x1xf32> to vector<1x8xf32>
    %285 = arith.subf %279, %284 : vector<1x8xf32>
    %286 = math.exp %285 : vector<1x8xf32>
    %cst_94 = arith.constant dense<0.000000e+00> : vector<1xf32>
    %287 = vector.multi_reduction <add>, %286, %cst_94 [1] : vector<1x8xf32> to vector<1xf32>
    %288 = vector.shape_cast %287 : vector<1xf32> to vector<1x1xf32>
    %289 = math.log %288 : vector<1x1xf32>
    %290 = arith.addf %283, %289 : vector<1x1xf32>
    %291 = tpu.iota {dimensions = array<i32: 1>} : vector<1x8xi32>
    %292 = vector.broadcast %281 : i32 to vector<1x8xi32>
    %293 = arith.cmpi eq, %291, %292 : vector<1x8xi32>
    %cst_95 = arith.constant 0.000000e+00 : f32
    %294 = vector.broadcast %cst_95 : f32 to vector<1x8xf32>
    %295 = arith.select %293, %279, %294 : vector<1x8xi1>, vector<1x8xf32>
    %cst_96 = arith.constant dense<0.000000e+00> : vector<1xf32>
    %296 = vector.multi_reduction <add>, %295, %cst_96 [1] : vector<1x8xf32> to vector<1xf32>
    %297 = vector.shape_cast %296 : vector<1xf32> to vector<1x1xf32>
    %c8_i32 = arith.constant 8 : i32
    %298 = arith.cmpi slt, %281, %c8_i32 : i32
    %299 = arith.extui %298 : i1 to i32
    %300 = arith.sitofp %299 : i32 to f32
    %301 = arith.subf %290, %297 : vector<1x1xf32>
    %302 = vector.broadcast %300 : f32 to vector<1x1xf32>
    %303 = arith.mulf %301, %302 : vector<1x1xf32>
    %c2_97 = arith.constant 2 : index
    %304 = memref.load %arg1[%c2_97] : memref<4xi32, #tpu.memory_space<smem>>
    %cst_98 = arith.constant dense<0xFF800000> : vector<1xf32>
    %305 = vector.multi_reduction <maximumf>, %280, %cst_98 [1] : vector<1x8xf32> to vector<1xf32>
    %306 = vector.shape_cast %305 : vector<1xf32> to vector<1x1xf32>
    %307 = vector.broadcast %306 : vector<1x1xf32> to vector<1x8xf32>
    %308 = arith.subf %280, %307 : vector<1x8xf32>
    %309 = math.exp %308 : vector<1x8xf32>
    %cst_99 = arith.constant dense<0.000000e+00> : vector<1xf32>
    %310 = vector.multi_reduction <add>, %309, %cst_99 [1] : vector<1x8xf32> to vector<1xf32>
    %311 = vector.shape_cast %310 : vector<1xf32> to vector<1x1xf32>
    %312 = math.log %311 : vector<1x1xf32>
    %313 = arith.addf %306, %312 : vector<1x1xf32>
    %314 = tpu.iota {dimensions = array<i32: 1>} : vector<1x8xi32>
    %315 = vector.broadcast %304 : i32 to vector<1x8xi32>
    %316 = arith.cmpi eq, %314, %315 : vector<1x8xi32>
    %cst_100 = arith.constant 0.000000e+00 : f32
    %317 = vector.broadcast %cst_100 : f32 to vector<1x8xf32>
    %318 = arith.select %316, %280, %317 : vector<1x8xi1>, vector<1x8xf32>
    %cst_101 = arith.constant dense<0.000000e+00> : vector<1xf32>
    %319 = vector.multi_reduction <add>, %318, %cst_101 [1] : vector<1x8xf32> to vector<1xf32>
    %320 = vector.shape_cast %319 : vector<1xf32> to vector<1x1xf32>
    %c8_i32_102 = arith.constant 8 : i32
    %321 = arith.cmpi slt, %304, %c8_i32_102 : i32
    %322 = arith.extui %321 : i1 to i32
    %323 = arith.sitofp %322 : i32 to f32
    %324 = arith.subf %313, %320 : vector<1x1xf32>
    %325 = vector.broadcast %323 : f32 to vector<1x1xf32>
    %326 = arith.mulf %324, %325 : vector<1x1xf32>
    %327 = arith.addf %278, %303 : vector<1x1xf32>
    %328 = arith.addf %278, %326 : vector<1x1xf32>
    %329 = vector.broadcast %300 : f32 to vector<1x1xf32>
    %330 = arith.addf %278, %329 : vector<1x1xf32>
    %331 = vector.broadcast %323 : f32 to vector<1x1xf32>
    %332 = arith.addf %278, %331 : vector<1x1xf32>
    %333 = vector.extract_strided_slice %276 {offsets = [0, 8], sizes = [1, 8], strides = [1, 1]} : vector<2x16xf32> to vector<1x8xf32>
    %334 = vector.extract_strided_slice %276 {offsets = [1, 8], sizes = [1, 8], strides = [1, 1]} : vector<2x16xf32> to vector<1x8xf32>
    %c1_103 = arith.constant 1 : index
    %335 = memref.load %arg1[%c1_103] : memref<4xi32, #tpu.memory_space<smem>>
    %cst_104 = arith.constant dense<0xFF800000> : vector<1xf32>
    %336 = vector.multi_reduction <maximumf>, %333, %cst_104 [1] : vector<1x8xf32> to vector<1xf32>
    %337 = vector.shape_cast %336 : vector<1xf32> to vector<1x1xf32>
    %338 = vector.broadcast %337 : vector<1x1xf32> to vector<1x8xf32>
    %339 = arith.subf %333, %338 : vector<1x8xf32>
    %340 = math.exp %339 : vector<1x8xf32>
    %cst_105 = arith.constant dense<0.000000e+00> : vector<1xf32>
    %341 = vector.multi_reduction <add>, %340, %cst_105 [1] : vector<1x8xf32> to vector<1xf32>
    %342 = vector.shape_cast %341 : vector<1xf32> to vector<1x1xf32>
    %343 = math.log %342 : vector<1x1xf32>
    %344 = arith.addf %337, %343 : vector<1x1xf32>
    %345 = tpu.iota {dimensions = array<i32: 1>} : vector<1x8xi32>
    %346 = vector.broadcast %335 : i32 to vector<1x8xi32>
    %347 = arith.cmpi eq, %345, %346 : vector<1x8xi32>
    %cst_106 = arith.constant 0.000000e+00 : f32
    %348 = vector.broadcast %cst_106 : f32 to vector<1x8xf32>
    %349 = arith.select %347, %333, %348 : vector<1x8xi1>, vector<1x8xf32>
    %cst_107 = arith.constant dense<0.000000e+00> : vector<1xf32>
    %350 = vector.multi_reduction <add>, %349, %cst_107 [1] : vector<1x8xf32> to vector<1xf32>
    %351 = vector.shape_cast %350 : vector<1xf32> to vector<1x1xf32>
    %c8_i32_108 = arith.constant 8 : i32
    %352 = arith.cmpi slt, %335, %c8_i32_108 : i32
    %353 = arith.extui %352 : i1 to i32
    %354 = arith.sitofp %353 : i32 to f32
    %355 = arith.subf %344, %351 : vector<1x1xf32>
    %356 = vector.broadcast %354 : f32 to vector<1x1xf32>
    %357 = arith.mulf %355, %356 : vector<1x1xf32>
    %c3_109 = arith.constant 3 : index
    %358 = memref.load %arg1[%c3_109] : memref<4xi32, #tpu.memory_space<smem>>
    %cst_110 = arith.constant dense<0xFF800000> : vector<1xf32>
    %359 = vector.multi_reduction <maximumf>, %334, %cst_110 [1] : vector<1x8xf32> to vector<1xf32>
    %360 = vector.shape_cast %359 : vector<1xf32> to vector<1x1xf32>
    %361 = vector.broadcast %360 : vector<1x1xf32> to vector<1x8xf32>
    %362 = arith.subf %334, %361 : vector<1x8xf32>
    %363 = math.exp %362 : vector<1x8xf32>
    %cst_111 = arith.constant dense<0.000000e+00> : vector<1xf32>
    %364 = vector.multi_reduction <add>, %363, %cst_111 [1] : vector<1x8xf32> to vector<1xf32>
    %365 = vector.shape_cast %364 : vector<1xf32> to vector<1x1xf32>
    %366 = math.log %365 : vector<1x1xf32>
    %367 = arith.addf %360, %366 : vector<1x1xf32>
    %368 = tpu.iota {dimensions = array<i32: 1>} : vector<1x8xi32>
    %369 = vector.broadcast %358 : i32 to vector<1x8xi32>
    %370 = arith.cmpi eq, %368, %369 : vector<1x8xi32>
    %cst_112 = arith.constant 0.000000e+00 : f32
    %371 = vector.broadcast %cst_112 : f32 to vector<1x8xf32>
    %372 = arith.select %370, %334, %371 : vector<1x8xi1>, vector<1x8xf32>
    %cst_113 = arith.constant dense<0.000000e+00> : vector<1xf32>
    %373 = vector.multi_reduction <add>, %372, %cst_113 [1] : vector<1x8xf32> to vector<1xf32>
    %374 = vector.shape_cast %373 : vector<1xf32> to vector<1x1xf32>
    %c8_i32_114 = arith.constant 8 : i32
    %375 = arith.cmpi slt, %358, %c8_i32_114 : i32
    %376 = arith.extui %375 : i1 to i32
    %377 = arith.sitofp %376 : i32 to f32
    %378 = arith.subf %367, %374 : vector<1x1xf32>
    %379 = vector.broadcast %377 : f32 to vector<1x1xf32>
    %380 = arith.mulf %378, %379 : vector<1x1xf32>
    %381 = arith.addf %327, %357 : vector<1x1xf32>
    %382 = arith.addf %328, %380 : vector<1x1xf32>
    %383 = vector.broadcast %354 : f32 to vector<1x1xf32>
    %384 = arith.addf %330, %383 : vector<1x1xf32>
    %385 = vector.broadcast %377 : f32 to vector<1x1xf32>
    %386 = arith.addf %332, %385 : vector<1x1xf32>
    %cst_115 = arith.constant 1.000000e+00 : f32
    %387 = vector.broadcast %cst_115 : f32 to vector<1x1xf32>
    %388 = arith.maximumf %384, %387 : vector<1x1xf32>
    %389 = arith.divf %381, %388 : vector<1x1xf32>
    %cst_116 = arith.constant 1.000000e+00 : f32
    %390 = vector.broadcast %cst_116 : f32 to vector<1x1xf32>
    %391 = arith.maximumf %386, %390 : vector<1x1xf32>
    %392 = arith.divf %382, %391 : vector<1x1xf32>
    %393 = arith.addf %389, %392 : vector<1x1xf32>
    %cst_117 = arith.constant 5.000000e-01 : f32
    %394 = vector.broadcast %cst_117 : f32 to vector<1x1xf32>
    %395 = arith.mulf %394, %393 : vector<1x1xf32>
    %c0_118 = arith.constant 0 : index
    %c0_119 = arith.constant 0 : index
    %396 = vector.load %arg5[%c0_118, %c0_119] : memref<1x1xf32, #tpu.memory_space<vmem>>, vector<1x1xf32>
    tpu.vector_store %arg5[%c0_118, %c0_119], %395 {strides = array<i32>} : memref<1x1xf32, #tpu.memory_space<vmem>>, vector<1x1xf32>,
    return
  }
}

</mosaic_0001>

<llo_original>
// kernel: squeeze.3
$region0: #{squeeze.3}
  %s0 = inlined_call_operand.vmem [shape: f32[16], index: 0, kind: input, shape index: {}]
  %s1 = inlined_call_operand.hbm [shape: f32[2,8], index: 1, kind: output, shape index: {}]
  $region1: #{squeeze.3} parent=0
    #allocation0 [shape = 'u8[1024]{0}', space=vmem, size = 0x400, scoped, tag = 'operand span for operand 1']
    #allocation1 [shape = 's32[1]{0}', space=sflag, size = 0x4, scoped, tag = 'scoped memory for squeeze.3']
    #allocation2 [shape = 'u8[4096]{0}', space=vmem, size = 0x1000, scoped, tag = 'scoped mem for output reshape']
    #allocation3 [shape = 'u8[4096]{0}', space=vmem, size = 0x1000, scoped, tag = 'scoped mem for input reshape']
    %2 = vsyncpa [#allocation1], 0
    %s4 = sshll.u32 1, 1
    %s5 = ssub.s32 %s4, 1
    %v6 = vld [vmem:[%s0] sm:%s5]
    %7 = vst [vmem:[#allocation3] sm:%s5] %v6
    %v8 = vld [vmem:[#allocation3] sm:$0x1]
    %vm9 = vcmask 64512
    %10 = vst.msk [vmem:[#allocation2] sm:$0x1] %vm9, %v8
    %v11 = vld [vmem:[#allocation3] sm:$0x1]
    %12 = vrot.lane.b32.xlu0 %v11, 120
    %v13 = vpop.permute.xlu0 %12
    %vm14 = vcmask 64512
    %s15 = scalar_lea.vmem [#allocation2], 1
    %16 = vst.msk [vmem:[%s15] sm:$0x1] %vm14, %v13
    %s18 = sshll.u32 1, 2
    %s19 = ssub.s32 %s18, 1
    %v21 = vld [vmem:[#allocation2] sm:%s19]
    %s22 = sshll.u32 1, 2
    %s23 = ssub.s32 %s22, 1
    %24 = vst [vmem:[#allocation0] sm:%s23] %v21
    %s26 = ssub.s32 32, 32
    %27 = vsyncadd [#allocation1], %s26
    %s29 = sshll.u32 [#allocation0], 4
    %s30 = int_to_ptr.vmem [resolvable:$true] %s29
    %32 = dma.vmem_to_hbm [thread:$0]  %s30, 32, %s1, [#allocation1]
    %33 = dma.done [#allocation1], 32
    %34 = vsyncpa [#allocation1], 1

// kernel: seq_supervised_forward.1
$region0: #{seq_supervised_forward.1}
  #allocation0 [shape = 'u32[]', space=smem, size = 0x4, offset = 0x4, fixed_abs, tag = 'smem constant byte address 0x4 - core index']
  #allocation1 [shape = 'u32[144,128]{1,0:T(1,128)}', space=vmem, size = 0x12000, scoped, tag = 'internal scratch']
  %s0 = inlined_call_operand.vmem [shape: s32[16,1], index: 0, kind: input, shape index: {}]
  %s1 = inlined_call_operand.vmem [shape: s32[4], index: 1, kind: input, shape index: {}]
  %s2 = inlined_call_operand.vmem [shape: f32[16,48], index: 2, kind: input, shape index: {}]
  %s3 = inlined_call_operand.vmem [shape: f32[2,96,192], index: 3, kind: input, shape index: {}]
  %s4 = inlined_call_operand.vmem [shape: f32[56,96], index: 4, kind: input, shape index: {}]
  %s5 = inlined_call_operand.hbm [shape: f32[1,1], index: 5, kind: output, shape index: {0}]
  %s6 = inlined_call_operand.vmem [shape: f32[2,16], index: 6, kind: output, shape index: {1}]
  %7 = xla_tuple %s5, %s6
  %s8 = sld [smem:[#allocation0]]
  $region42: #{seq_supervised_forward.1} parent=0
    _
  %s10 = ssub.s32 1, %s8
  %s11 = scalar_select 0, %s10, %s8
  $region1: #{seq_supervised_forward.1} parent=0
    #allocation2 [shape = 'u8[512]{0}', space=smem, size = 0x200, scoped, tag = 'input window, operand 1, single buffered']
    #allocation3 [shape = 's32[1]{0}', space=sflag, size = 0x4, scoped, tag = 'scoped memory for seq_supervised_forward.1']
    #allocation4 [shape = 's32[1]{0}', space=sflag, size = 0x4, scoped, tag = 'scoped memory for seq_supervised_forward.1']
    #allocation5 [shape = 'u8[512]{0}', space=vmem, size = 0x400, scoped, tag = 'output window, operand 0, single buffered']
    %12 = vsyncpa [#allocation4], 0
    %13 = vsyncpa [#allocation3], 0
    // Predicated region
    $region2: #{seq_supervised_forward.1} parent=1 // pred_check
      _
    $region3: #{seq_supervised_forward.1} parent=1 // pred_check_branch
      %15 = sbr.rel (0) target = $region5
    $region4: #{seq_supervised_forward.1} parent=1 // pred_region
      _
    $region5: #{seq_supervised_forward.1} parent=1 // pred_fallthru
      _
    // Predicated region
    $region6: #{seq_supervised_forward.1} parent=1 // pred_check
      _
    $region7: #{seq_supervised_forward.1} parent=1 // pred_check_branch
      %17 = sbr.rel (0) target = $region9
    $region8: #{seq_supervised_forward.1} parent=1 // pred_region
      %s19 = ssub.s32 16, 16
      %20 = vsyncadd [#allocation4], %s19
      %s22 = sshll.u32 %s1, 4
      %s23 = int_to_ptr.vmem [resolvable:$true] %s22
      %25 = dma.vmem_to_smem %s23, 16, [#allocation2], [#allocation4]
    $region9: #{seq_supervised_forward.1} parent=1 // pred_fallthru
      _
    // Predicated region
    $region10: #{seq_supervised_forward.1} parent=1 // pred_check
      _
    $region11: #{seq_supervised_forward.1} parent=1 // pred_check_branch
      %27 = sbr.rel (0) target = $region13
    $region12: #{seq_supervised_forward.1} parent=1 // pred_region
      _
    $region13: #{seq_supervised_forward.1} parent=1 // pred_fallthru
      _
    // Predicated region
    $region14: #{seq_supervised_forward.1} parent=1 // pred_check
      _
    $region15: #{seq_supervised_forward.1} parent=1 // pred_check_branch
      %29 = sbr.rel (0) target = $region17
    $region16: #{seq_supervised_forward.1} parent=1 // pred_region
      _
    $region17: #{seq_supervised_forward.1} parent=1 // pred_fallthru
      _
    // Predicated region
    $region18: #{seq_supervised_forward.1} parent=1 // pred_check
      _
    $region19: #{seq_supervised_forward.1} parent=1 // pred_check_branch
      %31 = sbr.rel (0) target = $region21
    $region20: #{seq_supervised_forward.1} parent=1 // pred_region
      _
    $region21: #{seq_supervised_forward.1} parent=1 // pred_fallthru
      _
    // Predicated region
    $region22: #{seq_supervised_forward.1} parent=1 // pred_check
      _
    $region23: #{seq_supervised_forward.1} parent=1 // pred_check_branch
      %33 = sbr.rel (0) target = $region25
    $region24: #{seq_supervised_forward.1} parent=1 // pred_region
      %34 = dma.done [#allocation4], 16
    $region25: #{seq_supervised_forward.1} parent=1 // pred_fallthru
      _
    %35 = sfence
    %v36 = vld [vmem:[%s0] sm:$0xff]
    %v37 = vld [vmem:[%s0 + $0x8] sm:$0xff]
    %v38 = vlaneseq
    %v39 = vand.u32 %v38, 127
    %40 = vset.pattern.permute.xlu0 0
    %41 = vperm.xlu0 %40, %v36
    %v42 = vpop.permute.xlu0 %41
    %43 = vset.pattern.permute.xlu0 0
    %44 = vperm.xlu0 %43, %v37
    %v45 = vpop.permute.xlu0 %44
    %vm46 = vcmp.eq.s32.totalorder %v39, %v42
    %vm47 = vcmp.eq.s32.totalorder %v39, %v45
    %v48 = vsel %vm46, 1, 0
    %v49 = vsel %vm47, 1, 0
    %v50 = vcvt.s32.f32 %v48
    %v51 = vcvt.s32.f32 %v49
    %v52 = vld [vmem:[%s4 + $0x18] sm:$0xff]
    %v53 = vld [vmem:[%s4 + $0x20] sm:$0xff]
    %v54 = vld [vmem:[%s4 + $0x28] sm:$0xff]
    %v55 = vld [vmem:[%s4 + $0x30] sm:$0xff]
    %v56 = vld [vmem:[%s2] sm:$0xff]
    %v57 = vld [vmem:[%s2 + $0x8] sm:$0xff]
    %vm58 = vcmask 261120
    %v60 = vsel %vm58, %v50, 0
    %v63 = vsel %vm58, %v51, 0
    %65 = vmatprep.subr.mxu0 0.0
    %66 = vmatpush1.msra.mxu0 0.0
    %67 = vmatprep.subr.mxu0 0.0
    %68 = vmatpush1.msra.mxu0 0.0
    %69 = vmatprep.subr.mxu0 0.0
    %70 = vmatpush1.msra.mxu0 0.0
    %71 = vmatprep.subr.mxu0 0.0
    %72 = vmatpush1.msra.mxu0 0.0
    %73 = vmatprep.subr.mxu0 0.0
    %74 = vmatpush1.msra.mxu0 0.0
    %75 = vmatprep.subr.mxu0 0.0
    %76 = vmatpush1.msra.mxu0 0.0
    %77 = vmatprep.subr.mxu0 0.0
    %78 = vmatpush1.msra.mxu0 0.0
    %79 = vmatprep.subr.mxu0 0.0
    %80 = vmatpush1.msra.mxu0 0.0
    %81 = vmatprep.subr.mxu0 0.0
    %82 = vmatpush1.msra.mxu0 0.0
    %83 = vmatprep.subr.mxu0 0.0
    %84 = vmatpush1.msra.mxu0 0.0
    %85 = vmatprep.subr.mxu0 0.0
    %86 = vmatpush1.msra.mxu0 0.0
    %87 = vmatprep.subr.mxu0 0.0
    %88 = vmatpush1.msra.mxu0 0.0
    %89 = vmatprep.subr.mxu0 0.0
    %90 = vmatpush1.msra.mxu0 %v55
    %91 = vmatprep.subr.mxu0 0.0
    %92 = vmatpush1.msra.mxu0 %v54
    %93 = vmatprep.subr.mxu0 0.0
    %94 = vmatpush1.msra.mxu0 %v53
    %95 = vmatprep.subr.mxu0 0.0
    %96 = vmatpush1.msra.mxu0 %v52
    %97 = vmatprep.subr.mxu0 0.0
    %98 = vmatpush2.msra.mxu0 0.0
    %99 = vmatprep.subr.mxu0 0.0
    %100 = vmatpush2.msra.mxu0 0.0
    %101 = vmatprep.subr.mxu0 0.0
    %102 = vmatpush2.msra.mxu0 0.0
    %103 = vmatprep.subr.mxu0 0.0
    %104 = vmatpush2.msra.mxu0 0.0
    %105 = vmatprep.subr.mxu0 0.0
    %106 = vmatpush2.msra.mxu0 0.0
    %107 = vmatprep.subr.mxu0 0.0
    %108 = vmatpush2.msra.mxu0 0.0
    %109 = vmatprep.subr.mxu0 0.0
    %110 = vmatpush2.msra.mxu0 0.0
    %111 = vmatprep.subr.mxu0 0.0
    %112 = vmatpush2.msra.mxu0 0.0
    %113 = vmatprep.subr.mxu0 0.0
    %114 = vmatpush2.msra.mxu0 0.0
    %115 = vmatprep.subr.mxu0 0.0
    %116 = vmatpush2.msra.mxu0 0.0
    %117 = vmatprep.subr.mxu0 0.0
    %118 = vmatpush2.msra.mxu0 0.0
    %119 = vmatprep.subr.mxu0 0.0
    %120 = vmatpush2.msra.mxu0 0.0
    %121 = vmatprep.subr.mxu0 0.0
    %122 = vmatpush2.msra.mxu0 0.0
    %123 = vmatprep.subr.mxu0 0.0
    %124 = vmatpush2.msra.mxu0 0.0
    %125 = vmatprep.subr.mxu0 0.0
    %126 = vmatpush2.msra.mxu0 0.0
    %127 = vmatprep.subr.mxu0 0.0
    %128 = vmatpush2.msra.mxu0 0.0
    %129 = vmatprep.mubr.f32.mxu0 0.0
    %130 = vmatmul.mubr.f32.gmra.mxu0 %v60
    %v131 = vpop.f32.mrf.mxu0
    %v132 = vadd.f32 %v56, %v131
    %v133 = vpop.f32.mrf.mxu0
    %134 = vmatprep.mubr.f32.mxu0 0.0
    %135 = vmatmul.mubr.f32.gmra.mxu0 %v63
    %v136 = vpop.f32.mrf.mxu0
    %v137 = vadd.f32 %v57, %v136
    %v138 = vpop.f32.mrf.mxu0
    %139 = vdwg.mxu0
    %v140 = vld [vmem:[%s4] sm:$0x1]
    %v141 = vld [vmem:[%s4 + $0x1] sm:$0x1]
    %v142 = vsel %vm58, %v132, 0.0
    %143 = vadd.xlane.f32.xlu0 %v142
    %v144 = vpop.xlane.xlu0 %143
    %v145 = vsel %vm58, %v137, 0.0
    %146 = vadd.xlane.f32.xlu0 %v145
    %v147 = vpop.xlane.xlu0 %146
    %v148 = vrcp.pop 32.0
    %v149 = vmul.f32 %v144, %v148
    %v150 = vmul.f32 %v147, %v148
    %v151 = vsub.f32 %v132, %v149
    %v152 = vsub.f32 %v137, %v150
    %v153 = vmul.f32 %v151, %v151
    %v154 = vmul.f32 %v152, %v152
    %v155 = vsel %vm58, %v153, 0.0
    %156 = vadd.xlane.f32.xlu0 %v155
    %v157 = vpop.xlane.xlu0 %156
    %v158 = vsel %vm58, %v154, 0.0
    %159 = vadd.xlane.f32.xlu0 %v158
    %v160 = vpop.xlane.xlu0 %159
    %v161 = vmul.f32 %v157, %v148
    %v162 = vmul.f32 %v160, %v148
    %v163 = vadd.f32 %v161, 1e-12
    %v164 = vadd.f32 %v162, 1e-12
    %v165 = vrsqrt.pop %v163
    %v166 = vrsqrt.pop %v164
    %v167 = vmul.f32 %v151, %v165
    %v168 = vmul.f32 %v152, %v166
    %v169 = vlaneseq
    %v170 = vshrl.u32 %v169, 7
    %v171 = vsub.s32 0, %v170
    %v172 = vrot.slane %v140, %v171
    %v173 = vmul.f32 %v167, %v172
    %v174 = vmul.f32 %v168, %v172
    %v175 = vlaneseq
    %v176 = vshrl.u32 %v175, 7
    %v177 = vsub.s32 0, %v176
    %v178 = vrot.slane %v141, %v177
    %v179 = vadd.f32 %v173, %v178
    %v180 = vadd.f32 %v174, %v178
    %v181 = vld [vmem:[%s3] sm:$0xff]
    %v182 = vld [vmem:[%s3 + $0x8] sm:$0xff]
    %v183 = vld [vmem:[%s3 + $0x10] sm:$0xff]
    %v184 = vld [vmem:[%s3 + $0x18] sm:$0xff]
    %v185 = vld [vmem:[%s3 + $0x20] sm:$0xff]
    %v186 = vld [vmem:[%s3 + $0x28] sm:$0xff]
    %v187 = vld [vmem:[%s3 + $0x30] sm:$0xff]
    %v188 = vld [vmem:[%s3 + $0x38] sm:$0xff]
    %v189 = vld [vmem:[%s3 + $0x40] sm:$0xff]
    %v190 = vld [vmem:[%s3 + $0x50] sm:$0xff]
    %v191 = vld [vmem:[%s3 + $0x60] sm:$0xff]
    %v192 = vld [vmem:[%s3 + $0x70] sm:$0xff]
    %v193 = vld [vmem:[%s3 + $0x80] sm:$0xff]
    %v194 = vld [vmem:[%s3 + $0x90] sm:$0xff]
    %v195 = vld [vmem:[%s3 + $0xa0] sm:$0xff]
    %v196 = vld [vmem:[%s3 + $0xb0] sm:$0xff]
    %v197 = vld [vmem:[%s4 + $0x2] sm:$0x1]
    %v198 = vld [vmem:[%s4 + $0x3] sm:$0x1]
    %v199 = vld [vmem:[%s4 + $0x4] sm:$0x1]
    %v200 = vld [vmem:[%s4 + $0x5] sm:$0x1]
    %v201 = vld [vmem:[%s4 + $0x6] sm:$0x1]
    %v202 = vld [vmem:[%s4 + $0x7] sm:$0x1]
    %v203 = vld [vmem:[%s4 + $0x8] sm:$0x1]
    %v204 = vld [vmem:[%s4 + $0x9] sm:$0x1]
    %v205 = vlaneseq
    %v206 = vshrl.u32 %v205, 7
    %v207 = vsub.s32 0, %v206
    %v208 = vrot.slane %v197, %v207
    %v210 = vsel %vm58, %v179, 0
    %v213 = vsel %vm58, %v180, 0
    %215 = vmatprep.subr.mxu0 0.0
    %216 = vmatpush1.msra.mxu0 0.0
    %217 = vmatprep.subr.mxu0 0.0
    %218 = vmatpush1.msra.mxu0 0.0
    %219 = vmatprep.subr.mxu0 0.0
    %220 = vmatpush1.msra.mxu0 0.0
    %221 = vmatprep.subr.mxu0 0.0
    %222 = vmatpush1.msra.mxu0 0.0
    %223 = vmatprep.subr.mxu0 0.0
    %224 = vmatpush1.msra.mxu0 0.0
    %225 = vmatprep.subr.mxu0 0.0
    %226 = vmatpush1.msra.mxu0 0.0
    %227 = vmatprep.subr.mxu0 0.0
    %228 = vmatpush1.msra.mxu0 0.0
    %229 = vmatprep.subr.mxu0 0.0
    %230 = vmatpush1.msra.mxu0 0.0
    %231 = vmatprep.subr.mxu0 0.0
    %232 = vmatpush1.msra.mxu0 0.0
    %233 = vmatprep.subr.mxu0 0.0
    %234 = vmatpush1.msra.mxu0 0.0
    %235 = vmatprep.subr.mxu0 0.0
    %236 = vmatpush1.msra.mxu0 0.0
    %237 = vmatprep.subr.mxu0 0.0
    %238 = vmatpush1.msra.mxu0 0.0
    %239 = vmatprep.subr.mxu0 0.0
    %240 = vmatpush1.msra.mxu0 %v187
    %241 = vmatprep.subr.mxu0 0.0
    %242 = vmatpush1.msra.mxu0 %v185
    %243 = vmatprep.subr.mxu0 0.0
    %244 = vmatpush1.msra.mxu0 %v183
    %245 = vmatprep.subr.mxu0 0.0
    %246 = vmatpush1.msra.mxu0 %v181
    %247 = vmatprep.subr.mxu0 0.0
    %248 = vmatpush2.msra.mxu0 0.0
    %249 = vmatprep.subr.mxu0 0.0
    %250 = vmatpush2.msra.mxu0 0.0
    %251 = vmatprep.subr.mxu0 0.0
    %252 = vmatpush2.msra.mxu0 0.0
    %253 = vmatprep.subr.mxu0 0.0
    %254 = vmatpush2.msra.mxu0 0.0
    %255 = vmatprep.subr.mxu0 0.0
    %256 = vmatpush2.msra.mxu0 0.0
    %257 = vmatprep.subr.mxu0 0.0
    %258 = vmatpush2.msra.mxu0 0.0
    %259 = vmatprep.subr.mxu0 0.0
    %260 = vmatpush2.msra.mxu0 0.0
    %261 = vmatprep.subr.mxu0 0.0
    %262 = vmatpush2.msra.mxu0 0.0
    %263 = vmatprep.subr.mxu0 0.0
    %264 = vmatpush2.msra.mxu0 0.0
    %265 = vmatprep.subr.mxu0 0.0
    %266 = vmatpush2.msra.mxu0 0.0
    %267 = vmatprep.subr.mxu0 0.0
    %268 = vmatpush2.msra.mxu0 0.0
    %269 = vmatprep.subr.mxu0 0.0
    %270 = vmatpush2.msra.mxu0 0.0
    %271 = vmatprep.subr.mxu0 0.0
    %272 = vmatpush2.msra.mxu0 0.0
    %273 = vmatprep.subr.mxu0 0.0
    %274 = vmatpush2.msra.mxu0 0.0
    %275 = vmatprep.subr.mxu0 0.0
    %276 = vmatpush2.msra.mxu0 0.0
    %277 = vmatprep.subr.mxu0 0.0
    %278 = vmatpush2.msra.mxu0 0.0
    %279 = vmatprep.mubr.f32.mxu0 0.0
    %280 = vmatmul.mubr.f32.gmra.mxu0 %v210
    %v281 = vpop.f32.mrf.mxu0
    %v282 = vadd.f32 %v208, %v281
    %v283 = vpop.f32.mrf.mxu0
    %284 = vmatprep.mubr.f32.mxu0 0.0
    %285 = vmatmul.mubr.f32.gmra.mxu0 %v213
    %v286 = vpop.f32.mrf.mxu0
    %v287 = vadd.f32 %v208, %v286
    %v288 = vpop.f32.mrf.mxu0
    %289 = vdwg.mxu0
    %292 = vrot.lane.b32.xlu0 %v282, 96
    %v293 = vpop.permute.xlu0 %292
    %294 = vrot.lane.b32.xlu0 %v287, 96
    %v295 = vpop.permute.xlu0 %294
    %298 = vrot.lane.b32.xlu0 %v56, 96
    %v299 = vpop.permute.xlu0 %298
    %300 = vrot.lane.b32.xlu0 %v57, 96
    %v301 = vpop.permute.xlu0 %300
    %vm304 = vcmask 130048
    %v305 = vsel %vm304, %v282, 0
    %v307 = vsel %vm304, %v287, 0
    %v309 = vsel %vm304, %v293, 0
    %v311 = vsel %vm304, %v295, 0
    %313 = vmatprep.subr.mxu0 0.0
    %314 = vmatpush1.xpose.msra.mxu0 0.0
    %315 = vmatprep.subr.mxu0 0.0
    %316 = vmatpush1.xpose.msra.mxu0 0.0
    %317 = vmatprep.subr.mxu0 0.0
    %318 = vmatpush1.xpose.msra.mxu0 0.0
    %319 = vmatprep.subr.mxu0 0.0
    %320 = vmatpush1.xpose.msra.mxu0 0.0
    %321 = vmatprep.subr.mxu0 0.0
    %322 = vmatpush1.xpose.msra.mxu0 0.0
    %323 = vmatprep.subr.mxu0 0.0
    %324 = vmatpush1.xpose.msra.mxu0 0.0
    %325 = vmatprep.subr.mxu0 0.0
    %326 = vmatpush1.xpose.msra.mxu0 0.0
    %327 = vmatprep.subr.mxu0 0.0
    %328 = vmatpush1.xpose.msra.mxu0 0.0
    %329 = vmatprep.subr.mxu0 0.0
    %330 = vmatpush1.xpose.msra.mxu0 0.0
    %331 = vmatprep.subr.mxu0 0.0
    %332 = vmatpush1.xpose.msra.mxu0 0.0
    %333 = vmatprep.subr.mxu0 0.0
    %334 = vmatpush1.xpose.msra.mxu0 0.0
    %335 = vmatprep.subr.mxu0 0.0
    %336 = vmatpush1.xpose.msra.mxu0 0.0
    %337 = vmatprep.subr.mxu0 0.0
    %338 = vmatpush1.xpose.msra.mxu0 0.0
    %339 = vmatprep.subr.mxu0 0.0
    %340 = vmatpush1.xpose.msra.mxu0 0.0
    %341 = vmatprep.subr.mxu0 0.0
    %342 = vmatpush1.xpose.msra.mxu0 %v311
    %343 = vmatprep.subr.mxu0 0.0
    %344 = vmatpush1.xpose.msra.mxu0 %v309
    %345 = vmatprep.subr.mxu0 0.0
    %346 = vmatpush2.xpose.msra.mxu0 0.0
    %347 = vmatprep.subr.mxu0 0.0
    %348 = vmatpush2.xpose.msra.mxu0 0.0
    %349 = vmatprep.subr.mxu0 0.0
    %350 = vmatpush2.xpose.msra.mxu0 0.0
    %351 = vmatprep.subr.mxu0 0.0
    %352 = vmatpush2.xpose.msra.mxu0 0.0
    %353 = vmatprep.subr.mxu0 0.0
    %354 = vmatpush2.xpose.msra.mxu0 0.0
    %355 = vmatprep.subr.mxu0 0.0
    %356 = vmatpush2.xpose.msra.mxu0 0.0
    %357 = vmatprep.subr.mxu0 0.0
    %358 = vmatpush2.xpose.msra.mxu0 0.0
    %359 = vmatprep.subr.mxu0 0.0
    %360 = vmatpush2.xpose.msra.mxu0 0.0
    %361 = vmatprep.subr.mxu0 0.0
    %362 = vmatpush2.xpose.msra.mxu0 0.0
    %363 = vmatprep.subr.mxu0 0.0
    %364 = vmatpush2.xpose.msra.mxu0 0.0
    %365 = vmatprep.subr.mxu0 0.0
    %366 = vmatpush2.xpose.msra.mxu0 0.0
    %367 = vmatprep.subr.mxu0 0.0
    %368 = vmatpush2.xpose.msra.mxu0 0.0
    %369 = vmatprep.subr.mxu0 0.0
    %370 = vmatpush2.xpose.msra.mxu0 0.0
    %371 = vmatprep.subr.mxu0 0.0
    %372 = vmatpush2.xpose.msra.mxu0 0.0
    %373 = vmatprep.subr.mxu0 0.0
    %374 = vmatpush2.xpose.msra.mxu0 0.0
    %375 = vmatprep.subr.mxu0 0.0
    %376 = vmatpush2.xpose.msra.mxu0 0.0
    %377 = vmatprep.mubr.f32.mxu0 0.0
    %378 = vmatmul.mubr.f32.gmra.mxu0 %v305
    %v379 = vpop.f32.mrf.mxu0
    %v380 = vadd.f32 %v299, %v379
    %v381 = vpop.f32.mrf.mxu0
    %382 = vmatprep.mubr.f32.mxu0 0.0
    %383 = vmatmul.mubr.f32.gmra.mxu0 %v307
    %v384 = vpop.f32.mrf.mxu0
    %v385 = vadd.f32 %v301, %v384
    %v386 = vpop.f32.mrf.mxu0
    %387 = vdwg.mxu0
    %v388 = vsel %vm304, %v380, -inf
    %389 = vmax.xlane.f32.xlu0 %v388
    %v390 = vpop.xlane.xlu0 %389
    %v391 = vsel %vm304, %v385, -inf
    %392 = vmax.xlane.f32.xlu0 %v391
    %v393 = vpop.xlane.xlu0 %392
    %v394 = vsub.f32 %v380, %v390
    %v395 = vsub.f32 %v385, %v393
    %v396 = vmul.f32 %v394, 1.442695
    %v397 = vpow.pop %v396
    %v398 = vmul.f32 %v395, 1.442695
    %v399 = vpow.pop %v398
    %v400 = vsel %vm304, %v397, 0.0
    %401 = vadd.xlane.f32.xlu0 %v400
    %v402 = vpop.xlane.xlu0 %401
    %v403 = vsel %vm304, %v399, 0.0
    %404 = vadd.xlane.f32.xlu0 %v403
    %v405 = vpop.xlane.xlu0 %404
    %v406 = vrcp.pop %v402
    %v407 = vrcp.pop %v405
    %v408 = vmul.f32 %v397, %v406
    %v409 = vmul.f32 %v399, %v407
    %410 = vrot.lane.b32.xlu0 %v282, 64
    %v411 = vpop.permute.xlu0 %410
    %412 = vrot.lane.b32.xlu0 %v287, 64
    %v413 = vpop.permute.xlu0 %412
    %v417 = vsel %vm304, %v408, 0
    %v420 = vsel %vm304, %v409, 0
    %422 = vmatprep.subr.mxu0 0.0
    %423 = vmatpush1.msra.mxu0 0.0
    %424 = vmatprep.subr.mxu0 0.0
    %425 = vmatpush1.msra.mxu0 0.0
    %426 = vmatprep.subr.mxu0 0.0
    %427 = vmatpush1.msra.mxu0 0.0
    %428 = vmatprep.subr.mxu0 0.0
    %429 = vmatpush1.msra.mxu0 0.0
    %430 = vmatprep.subr.mxu0 0.0
    %431 = vmatpush1.msra.mxu0 0.0
    %432 = vmatprep.subr.mxu0 0.0
    %433 = vmatpush1.msra.mxu0 0.0
    %434 = vmatprep.subr.mxu0 0.0
    %435 = vmatpush1.msra.mxu0 0.0
    %436 = vmatprep.subr.mxu0 0.0
    %437 = vmatpush1.msra.mxu0 0.0
    %438 = vmatprep.subr.mxu0 0.0
    %439 = vmatpush1.msra.mxu0 0.0
    %440 = vmatprep.subr.mxu0 0.0
    %441 = vmatpush1.msra.mxu0 0.0
    %442 = vmatprep.subr.mxu0 0.0
    %443 = vmatpush1.msra.mxu0 0.0
    %444 = vmatprep.subr.mxu0 0.0
    %445 = vmatpush1.msra.mxu0 0.0
    %446 = vmatprep.subr.mxu0 0.0
    %447 = vmatpush1.msra.mxu0 0.0
    %448 = vmatprep.subr.mxu0 0.0
    %449 = vmatpush1.msra.mxu0 0.0
    %450 = vmatprep.subr.mxu0 0.0
    %451 = vmatpush1.msra.mxu0 %v413
    %452 = vmatprep.subr.mxu0 0.0
    %453 = vmatpush1.msra.mxu0 %v411
    %454 = vmatprep.subr.mxu0 0.0
    %455 = vmatpush2.msra.mxu0 0.0
    %456 = vmatprep.subr.mxu0 0.0
    %457 = vmatpush2.msra.mxu0 0.0
    %458 = vmatprep.subr.mxu0 0.0
    %459 = vmatpush2.msra.mxu0 0.0
    %460 = vmatprep.subr.mxu0 0.0
    %461 = vmatpush2.msra.mxu0 0.0
    %462 = vmatprep.subr.mxu0 0.0
    %463 = vmatpush2.msra.mxu0 0.0
    %464 = vmatprep.subr.mxu0 0.0
    %465 = vmatpush2.msra.mxu0 0.0
    %466 = vmatprep.subr.mxu0 0.0
    %467 = vmatpush2.msra.mxu0 0.0
    %468 = vmatprep.subr.mxu0 0.0
    %469 = vmatpush2.msra.mxu0 0.0
    %470 = vmatprep.subr.mxu0 0.0
    %471 = vmatpush2.msra.mxu0 0.0
    %472 = vmatprep.subr.mxu0 0.0
    %473 = vmatpush2.msra.mxu0 0.0
    %474 = vmatprep.subr.mxu0 0.0
    %475 = vmatpush2.msra.mxu0 0.0
    %476 = vmatprep.subr.mxu0 0.0
    %477 = vmatpush2.msra.mxu0 0.0
    %478 = vmatprep.subr.mxu0 0.0
    %479 = vmatpush2.msra.mxu0 0.0
    %480 = vmatprep.subr.mxu0 0.0
    %481 = vmatpush2.msra.mxu0 0.0
    %482 = vmatprep.subr.mxu0 0.0
    %483 = vmatpush2.msra.mxu0 0.0
    %484 = vmatprep.subr.mxu0 0.0
    %485 = vmatpush2.msra.mxu0 0.0
    %486 = vmatprep.mubr.f32.mxu0 0.0
    %487 = vmatmul.mubr.f32.gmra.mxu0 %v417
    %v488 = vpop.f32.mrf.mxu0
    %v489 = vadd.f32 0.0, %v488
    %v490 = vpop.f32.mrf.mxu0
    %491 = vmatprep.mubr.f32.mxu0 0.0
    %492 = vmatmul.mubr.f32.gmra.mxu0 %v420
    %v493 = vpop.f32.mrf.mxu0
    %v494 = vadd.f32 0.0, %v493
    %v495 = vpop.f32.mrf.mxu0
    %496 = vdwg.mxu0
    %497 = vrot.lane.b32.xlu0 %v282, 112
    %v498 = vpop.permute.xlu0 %497
    %499 = vrot.lane.b32.xlu0 %v287, 112
    %v500 = vpop.permute.xlu0 %499
    %501 = vrot.lane.b32.xlu0 %v282, 80
    %v502 = vpop.permute.xlu0 %501
    %503 = vrot.lane.b32.xlu0 %v287, 80
    %v504 = vpop.permute.xlu0 %503
    %v505 = vsel %vm304, %v498, 0
    %v507 = vsel %vm304, %v500, 0
    %v509 = vsel %vm304, %v502, 0
    %v511 = vsel %vm304, %v504, 0
    %513 = vmatprep.subr.mxu0 0.0
    %514 = vmatpush1.xpose.msra.mxu0 0.0
    %515 = vmatprep.subr.mxu0 0.0
    %516 = vmatpush1.xpose.msra.mxu0 0.0
    %517 = vmatprep.subr.mxu0 0.0
    %518 = vmatpush1.xpose.msra.mxu0 0.0
    %519 = vmatprep.subr.mxu0 0.0
    %520 = vmatpush1.xpose.msra.mxu0 0.0
    %521 = vmatprep.subr.mxu0 0.0
    %522 = vmatpush1.xpose.msra.mxu0 0.0
    %523 = vmatprep.subr.mxu0 0.0
    %524 = vmatpush1.xpose.msra.mxu0 0.0
    %525 = vmatprep.subr.mxu0 0.0
    %526 = vmatpush1.xpose.msra.mxu0 0.0
    %527 = vmatprep.subr.mxu0 0.0
    %528 = vmatpush1.xpose.msra.mxu0 0.0
    %529 = vmatprep.subr.mxu0 0.0
    %530 = vmatpush1.xpose.msra.mxu0 0.0
    %531 = vmatprep.subr.mxu0 0.0
    %532 = vmatpush1.xpose.msra.mxu0 0.0
    %533 = vmatprep.subr.mxu0 0.0
    %534 = vmatpush1.xpose.msra.mxu0 0.0
    %535 = vmatprep.subr.mxu0 0.0
    %536 = vmatpush1.xpose.msra.mxu0 0.0
    %537 = vmatprep.subr.mxu0 0.0
    %538 = vmatpush1.xpose.msra.mxu0 0.0
    %539 = vmatprep.subr.mxu0 0.0
    %540 = vmatpush1.xpose.msra.mxu0 0.0
    %541 = vmatprep.subr.mxu0 0.0
    %542 = vmatpush1.xpose.msra.mxu0 %v511
    %543 = vmatprep.subr.mxu0 0.0
    %544 = vmatpush1.xpose.msra.mxu0 %v509
    %545 = vmatprep.subr.mxu0 0.0
    %546 = vmatpush2.xpose.msra.mxu0 0.0
    %547 = vmatprep.subr.mxu0 0.0
    %548 = vmatpush2.xpose.msra.mxu0 0.0
    %549 = vmatprep.subr.mxu0 0.0
    %550 = vmatpush2.xpose.msra.mxu0 0.0
    %551 = vmatprep.subr.mxu0 0.0
    %552 = vmatpush2.xpose.msra.mxu0 0.0
    %553 = vmatprep.subr.mxu0 0.0
    %554 = vmatpush2.xpose.msra.mxu0 0.0
    %555 = vmatprep.subr.mxu0 0.0
    %556 = vmatpush2.xpose.msra.mxu0 0.0
    %557 = vmatprep.subr.mxu0 0.0
    %558 = vmatpush2.xpose.msra.mxu0 0.0
    %559 = vmatprep.subr.mxu0 0.0
    %560 = vmatpush2.xpose.msra.mxu0 0.0
    %561 = vmatprep.subr.mxu0 0.0
    %562 = vmatpush2.xpose.msra.mxu0 0.0
    %563 = vmatprep.subr.mxu0 0.0
    %564 = vmatpush2.xpose.msra.mxu0 0.0
    %565 = vmatprep.subr.mxu0 0.0
    %566 = vmatpush2.xpose.msra.mxu0 0.0
    %567 = vmatprep.subr.mxu0 0.0
    %568 = vmatpush2.xpose.msra.mxu0 0.0
    %569 = vmatprep.subr.mxu0 0.0
    %570 = vmatpush2.xpose.msra.mxu0 0.0
    %571 = vmatprep.subr.mxu0 0.0
    %572 = vmatpush2.xpose.msra.mxu0 0.0
    %573 = vmatprep.subr.mxu0 0.0
    %574 = vmatpush2.xpose.msra.mxu0 0.0
    %575 = vmatprep.subr.mxu0 0.0
    %576 = vmatpush2.xpose.msra.mxu0 0.0
    %577 = vmatprep.mubr.f32.mxu0 0.0
    %578 = vmatmul.mubr.f32.gmra.mxu0 %v505
    %v579 = vpop.f32.mrf.mxu0
    %v580 = vadd.f32 %v299, %v579
    %v581 = vpop.f32.mrf.mxu0
    %582 = vmatprep.mubr.f32.mxu0 0.0
    %583 = vmatmul.mubr.f32.gmra.mxu0 %v507
    %v584 = vpop.f32.mrf.mxu0
    %v585 = vadd.f32 %v301, %v584
    %v586 = vpop.f32.mrf.mxu0
    %587 = vdwg.mxu0
    %v588 = vsel %vm304, %v580, -inf
    %589 = vmax.xlane.f32.xlu0 %v588
    %v590 = vpop.xlane.xlu0 %589
    %v591 = vsel %vm304, %v585, -inf
    %592 = vmax.xlane.f32.xlu0 %v591
    %v593 = vpop.xlane.xlu0 %592
    %v594 = vsub.f32 %v580, %v590
    %v595 = vsub.f32 %v585, %v593
    %v596 = vmul.f32 %v594, 1.442695
    %v597 = vpow.pop %v596
    %v598 = vmul.f32 %v595, 1.442695
    %v599 = vpow.pop %v598
    %v600 = vsel %vm304, %v597, 0.0
    %601 = vadd.xlane.f32.xlu0 %v600
    %v602 = vpop.xlane.xlu0 %601
    %v603 = vsel %vm304, %v599, 0.0
    %604 = vadd.xlane.f32.xlu0 %v603
    %v605 = vpop.xlane.xlu0 %604
    %v606 = vrcp.pop %v602
    %v607 = vrcp.pop %v605
    %v608 = vmul.f32 %v597, %v606
    %v609 = vmul.f32 %v599, %v607
    %610 = vrot.lane.b32.xlu0 %v282, 48
    %v611 = vpop.permute.xlu0 %610
    %612 = vrot.lane.b32.xlu0 %v287, 48
    %v613 = vpop.permute.xlu0 %612
    %v617 = vsel %vm304, %v608, 0
    %v620 = vsel %vm304, %v609, 0
    %622 = vmatprep.subr.mxu0 0.0
    %623 = vmatpush1.msra.mxu0 0.0
    %624 = vmatprep.subr.mxu0 0.0
    %625 = vmatpush1.msra.mxu0 0.0
    %626 = vmatprep.subr.mxu0 0.0
    %627 = vmatpush1.msra.mxu0 0.0
    %628 = vmatprep.subr.mxu0 0.0
    %629 = vmatpush1.msra.mxu0 0.0
    %630 = vmatprep.subr.mxu0 0.0
    %631 = vmatpush1.msra.mxu0 0.0
    %632 = vmatprep.subr.mxu0 0.0
    %633 = vmatpush1.msra.mxu0 0.0
    %634 = vmatprep.subr.mxu0 0.0
    %635 = vmatpush1.msra.mxu0 0.0
    %636 = vmatprep.subr.mxu0 0.0
    %637 = vmatpush1.msra.mxu0 0.0
    %638 = vmatprep.subr.mxu0 0.0
    %639 = vmatpush1.msra.mxu0 0.0
    %640 = vmatprep.subr.mxu0 0.0
    %641 = vmatpush1.msra.mxu0 0.0
    %642 = vmatprep.subr.mxu0 0.0
    %643 = vmatpush1.msra.mxu0 0.0
    %644 = vmatprep.subr.mxu0 0.0
    %645 = vmatpush1.msra.mxu0 0.0
    %646 = vmatprep.subr.mxu0 0.0
    %647 = vmatpush1.msra.mxu0 0.0
    %648 = vmatprep.subr.mxu0 0.0
    %649 = vmatpush1.msra.mxu0 0.0
    %650 = vmatprep.subr.mxu0 0.0
    %651 = vmatpush1.msra.mxu0 %v613
    %652 = vmatprep.subr.mxu0 0.0
    %653 = vmatpush1.msra.mxu0 %v611
    %654 = vmatprep.subr.mxu0 0.0
    %655 = vmatpush2.msra.mxu0 0.0
    %656 = vmatprep.subr.mxu0 0.0
    %657 = vmatpush2.msra.mxu0 0.0
    %658 = vmatprep.subr.mxu0 0.0
    %659 = vmatpush2.msra.mxu0 0.0
    %660 = vmatprep.subr.mxu0 0.0
    %661 = vmatpush2.msra.mxu0 0.0
    %662 = vmatprep.subr.mxu0 0.0
    %663 = vmatpush2.msra.mxu0 0.0
    %664 = vmatprep.subr.mxu0 0.0
    %665 = vmatpush2.msra.mxu0 0.0
    %666 = vmatprep.subr.mxu0 0.0
    %667 = vmatpush2.msra.mxu0 0.0
    %668 = vmatprep.subr.mxu0 0.0
    %669 = vmatpush2.msra.mxu0 0.0
    %670 = vmatprep.subr.mxu0 0.0
    %671 = vmatpush2.msra.mxu0 0.0
    %672 = vmatprep.subr.mxu0 0.0
    %673 = vmatpush2.msra.mxu0 0.0
    %674 = vmatprep.subr.mxu0 0.0
    %675 = vmatpush2.msra.mxu0 0.0
    %676 = vmatprep.subr.mxu0 0.0
    %677 = vmatpush2.msra.mxu0 0.0
    %678 = vmatprep.subr.mxu0 0.0
    %679 = vmatpush2.msra.mxu0 0.0
    %680 = vmatprep.subr.mxu0 0.0
    %681 = vmatpush2.msra.mxu0 0.0
    %682 = vmatprep.subr.mxu0 0.0
    %683 = vmatpush2.msra.mxu0 0.0
    %684 = vmatprep.subr.mxu0 0.0
    %685 = vmatpush2.msra.mxu0 0.0
    %686 = vmatprep.mubr.f32.mxu0 0.0
    %687 = vmatmul.mubr.f32.gmra.mxu0 %v617
    %v688 = vpop.f32.mrf.mxu0
    %v689 = vadd.f32 0.0, %v688
    %v690 = vpop.f32.mrf.mxu0
    %691 = vmatprep.mubr.f32.mxu0 0.0
    %692 = vmatmul.mubr.f32.gmra.mxu0 %v620
    %v693 = vpop.f32.mrf.mxu0
    %v694 = vadd.f32 0.0, %v693
    %v695 = vpop.f32.mrf.mxu0
    %696 = vdwg.mxu0
    %699 = vrot.lane.b32.xlu0 %v689, 16
    %v700 = vpop.permute.xlu0 %699
    %701 = vrot.lane.b32.xlu0 %v694, 16
    %v702 = vpop.permute.xlu0 %701
    %v705 = vsel %vm304, %v489, %v700
    %v706 = vsel %vm304, %v494, %v702
    %v707 = vlaneseq
    %v708 = vshrl.u32 %v707, 7
    %v709 = vsub.s32 0, %v708
    %v710 = vrot.slane %v198, %v709
    %715 = vrot.lane.b32.xlu0 %v181, 32
    %v716 = vpop.permute.xlu0 %715
    %717 = vrot.lane.b32.xlu0 %v183, 32
    %v718 = vpop.permute.xlu0 %717
    %719 = vrot.lane.b32.xlu0 %v185, 32
    %v720 = vpop.permute.xlu0 %719
    %721 = vrot.lane.b32.xlu0 %v187, 32
    %v722 = vpop.permute.xlu0 %721
    %v728 = vsel %vm58, %v705, 0
    %v731 = vsel %vm58, %v706, 0
    %733 = vmatprep.subr.mxu0 0.0
    %734 = vmatpush1.msra.mxu0 0.0
    %735 = vmatprep.subr.mxu0 0.0
    %736 = vmatpush1.msra.mxu0 0.0
    %737 = vmatprep.subr.mxu0 0.0
    %738 = vmatpush1.msra.mxu0 0.0
    %739 = vmatprep.subr.mxu0 0.0
    %740 = vmatpush1.msra.mxu0 0.0
    %741 = vmatprep.subr.mxu0 0.0
    %742 = vmatpush1.msra.mxu0 0.0
    %743 = vmatprep.subr.mxu0 0.0
    %744 = vmatpush1.msra.mxu0 0.0
    %745 = vmatprep.subr.mxu0 0.0
    %746 = vmatpush1.msra.mxu0 0.0
    %747 = vmatprep.subr.mxu0 0.0
    %748 = vmatpush1.msra.mxu0 0.0
    %749 = vmatprep.subr.mxu0 0.0
    %750 = vmatpush1.msra.mxu0 0.0
    %751 = vmatprep.subr.mxu0 0.0
    %752 = vmatpush1.msra.mxu0 0.0
    %753 = vmatprep.subr.mxu0 0.0
    %754 = vmatpush1.msra.mxu0 0.0
    %755 = vmatprep.subr.mxu0 0.0
    %756 = vmatpush1.msra.mxu0 0.0
    %757 = vmatprep.subr.mxu0 0.0
    %758 = vmatpush1.msra.mxu0 %v722
    %759 = vmatprep.subr.mxu0 0.0
    %760 = vmatpush1.msra.mxu0 %v720
    %761 = vmatprep.subr.mxu0 0.0
    %762 = vmatpush1.msra.mxu0 %v718
    %763 = vmatprep.subr.mxu0 0.0
    %764 = vmatpush1.msra.mxu0 %v716
    %765 = vmatprep.subr.mxu0 0.0
    %766 = vmatpush2.msra.mxu0 0.0
    %767 = vmatprep.subr.mxu0 0.0
    %768 = vmatpush2.msra.mxu0 0.0
    %769 = vmatprep.subr.mxu0 0.0
    %770 = vmatpush2.msra.mxu0 0.0
    %771 = vmatprep.subr.mxu0 0.0
    %772 = vmatpush2.msra.mxu0 0.0
    %773 = vmatprep.subr.mxu0 0.0
    %774 = vmatpush2.msra.mxu0 0.0
    %775 = vmatprep.subr.mxu0 0.0
    %776 = vmatpush2.msra.mxu0 0.0
    %777 = vmatprep.subr.mxu0 0.0
    %778 = vmatpush2.msra.mxu0 0.0
    %779 = vmatprep.subr.mxu0 0.0
    %780 = vmatpush2.msra.mxu0 0.0
    %781 = vmatprep.subr.mxu0 0.0
    %782 = vmatpush2.msra.mxu0 0.0
    %783 = vmatprep.subr.mxu0 0.0
    %784 = vmatpush2.msra.mxu0 0.0
    %785 = vmatprep.subr.mxu0 0.0
    %786 = vmatpush2.msra.mxu0 0.0
    %787 = vmatprep.subr.mxu0 0.0
    %788 = vmatpush2.msra.mxu0 0.0
    %789 = vmatprep.subr.mxu0 0.0
    %790 = vmatpush2.msra.mxu0 0.0
    %791 = vmatprep.subr.mxu0 0.0
    %792 = vmatpush2.msra.mxu0 0.0
    %793 = vmatprep.subr.mxu0 0.0
    %794 = vmatpush2.msra.mxu0 0.0
    %795 = vmatprep.subr.mxu0 0.0
    %796 = vmatpush2.msra.mxu0 0.0
    %797 = vmatprep.mubr.f32.mxu0 0.0
    %798 = vmatmul.mubr.f32.gmra.mxu0 %v728
    %v799 = vpop.f32.mrf.mxu0
    %v800 = vadd.f32 %v710, %v799
    %v801 = vpop.f32.mrf.mxu0
    %802 = vmatprep.mubr.f32.mxu0 0.0
    %803 = vmatmul.mubr.f32.gmra.mxu0 %v731
    %v804 = vpop.f32.mrf.mxu0
    %v805 = vadd.f32 %v710, %v804
    %v806 = vpop.f32.mrf.mxu0
    %807 = vdwg.mxu0
    %v808 = vadd.f32 %v800, %v179
    %v809 = vadd.f32 %v805, %v180
    %v810 = vsel %vm58, %v808, 0.0
    %811 = vadd.xlane.f32.xlu0 %v810
    %v812 = vpop.xlane.xlu0 %811
    %v813 = vsel %vm58, %v809, 0.0
    %814 = vadd.xlane.f32.xlu0 %v813
    %v815 = vpop.xlane.xlu0 %814
    %v816 = vmul.f32 %v812, %v148
    %v817 = vmul.f32 %v815, %v148
    %v818 = vsub.f32 %v808, %v816
    %v819 = vsub.f32 %v809, %v817
    %v820 = vmul.f32 %v818, %v818
    %v821 = vmul.f32 %v819, %v819
    %v822 = vsel %vm58, %v820, 0.0
    %823 = vadd.xlane.f32.xlu0 %v822
    %v824 = vpop.xlane.xlu0 %823
    %v825 = vsel %vm58, %v821, 0.0
    %826 = vadd.xlane.f32.xlu0 %v825
    %v827 = vpop.xlane.xlu0 %826
    %v828 = vmul.f32 %v824, %v148
    %v829 = vmul.f32 %v827, %v148
    %v830 = vadd.f32 %v828, 1e-12
    %v831 = vadd.f32 %v829, 1e-12
    %v832 = vrsqrt.pop %v830
    %v833 = vrsqrt.pop %v831
    %v834 = vmul.f32 %v818, %v832
    %v835 = vmul.f32 %v819, %v833
    %v836 = vlaneseq
    %v837 = vshrl.u32 %v836, 7
    %v838 = vsub.s32 0, %v837
    %v839 = vrot.slane %v199, %v838
    %v840 = vmul.f32 %v834, %v839
    %v841 = vmul.f32 %v835, %v839
    %v842 = vlaneseq
    %v843 = vshrl.u32 %v842, 7
    %v844 = vsub.s32 0, %v843
    %v845 = vrot.slane %v200, %v844
    %v846 = vadd.f32 %v840, %v845
    %v847 = vadd.f32 %v841, %v845
    %v848 = vlaneseq
    %v849 = vshrl.u32 %v848, 7
    %v850 = vsub.s32 0, %v849
    %v851 = vrot.slane %v201, %v850
    %v853 = vsel %vm58, %v846, 0
    %v856 = vsel %vm58, %v847, 0
    %858 = vmatprep.subr.mxu0 0.0
    %859 = vmatpush1.msra.mxu0 0.0
    %860 = vmatprep.subr.mxu0 0.0
    %861 = vmatpush1.msra.mxu0 0.0
    %862 = vmatprep.subr.mxu0 0.0
    %863 = vmatpush1.msra.mxu0 0.0
    %864 = vmatprep.subr.mxu0 0.0
    %865 = vmatpush1.msra.mxu0 0.0
    %866 = vmatprep.subr.mxu0 0.0
    %867 = vmatpush1.msra.mxu0 0.0
    %868 = vmatprep.subr.mxu0 0.0
    %869 = vmatpush1.msra.mxu0 0.0
    %870 = vmatprep.subr.mxu0 0.0
    %871 = vmatpush1.msra.mxu0 0.0
    %872 = vmatprep.subr.mxu0 0.0
    %873 = vmatpush1.msra.mxu0 0.0
    %874 = vmatprep.subr.mxu0 0.0
    %875 = vmatpush1.msra.mxu0 0.0
    %876 = vmatprep.subr.mxu0 0.0
    %877 = vmatpush1.msra.mxu0 0.0
    %878 = vmatprep.subr.mxu0 0.0
    %879 = vmatpush1.msra.mxu0 0.0
    %880 = vmatprep.subr.mxu0 0.0
    %881 = vmatpush1.msra.mxu0 0.0
    %882 = vmatprep.subr.mxu0 0.0
    %883 = vmatpush1.msra.mxu0 %v188
    %884 = vmatprep.subr.mxu0 0.0
    %885 = vmatpush1.msra.mxu0 %v186
    %886 = vmatprep.subr.mxu0 0.0
    %887 = vmatpush1.msra.mxu0 %v184
    %888 = vmatprep.subr.mxu0 0.0
    %889 = vmatpush1.msra.mxu0 %v182
    %890 = vmatprep.subr.mxu0 0.0
    %891 = vmatpush2.msra.mxu0 0.0
    %892 = vmatprep.subr.mxu0 0.0
    %893 = vmatpush2.msra.mxu0 0.0
    %894 = vmatprep.subr.mxu0 0.0
    %895 = vmatpush2.msra.mxu0 0.0
    %896 = vmatprep.subr.mxu0 0.0
    %897 = vmatpush2.msra.mxu0 0.0
    %898 = vmatprep.subr.mxu0 0.0
    %899 = vmatpush2.msra.mxu0 0.0
    %900 = vmatprep.subr.mxu0 0.0
    %901 = vmatpush2.msra.mxu0 0.0
    %902 = vmatprep.subr.mxu0 0.0
    %903 = vmatpush2.msra.mxu0 0.0
    %904 = vmatprep.subr.mxu0 0.0
    %905 = vmatpush2.msra.mxu0 0.0
    %906 = vmatprep.subr.mxu0 0.0
    %907 = vmatpush2.msra.mxu0 0.0
    %908 = vmatprep.subr.mxu0 0.0
    %909 = vmatpush2.msra.mxu0 0.0
    %910 = vmatprep.subr.mxu0 0.0
    %911 = vmatpush2.msra.mxu0 0.0
    %912 = vmatprep.subr.mxu0 0.0
    %913 = vmatpush2.msra.mxu0 0.0
    %914 = vmatprep.subr.mxu0 0.0
    %915 = vmatpush2.msra.mxu0 0.0
    %916 = vmatprep.subr.mxu0 0.0
    %917 = vmatpush2.msra.mxu0 0.0
    %918 = vmatprep.subr.mxu0 0.0
    %919 = vmatpush2.msra.mxu0 0.0
    %920 = vmatprep.subr.mxu0 0.0
    %921 = vmatpush2.msra.mxu0 0.0
    %922 = vmatprep.mubr.f32.mxu0 0.0
    %923 = vmatmul.mubr.f32.gmra.mxu0 %v853
    %v924 = vpop.f32.mrf.mxu0
    %v925 = vadd.f32 %v851, %v924
    %v926 = vpop.f32.mrf.mxu0
    %927 = vmatprep.mubr.f32.mxu0 0.0
    %928 = vmatmul.mubr.f32.gmra.mxu0 %v856
    %v929 = vpop.f32.mrf.mxu0
    %v930 = vadd.f32 %v851, %v929
    %v931 = vpop.f32.mrf.mxu0
    %932 = vdwg.mxu0
    %v933 = vmul.f32 %v925, 0.5
    %v934 = vmul.f32 %v930, 0.5
    %v935 = vmul.f32 %v925, 0.70710677
    %v936 = vmul.f32 %v930, 0.70710677
    %v937 = verf.f32.pop %v935
    %v938 = verf.f32.pop %v936
    %v939 = vadd.f32 %v937, 1.0
    %v940 = vadd.f32 %v938, 1.0
    %v941 = vmul.f32 %v933, %v939
    %v942 = vmul.f32 %v934, %v940
    %v943 = vlaneseq
    %v944 = vshrl.u32 %v943, 7
    %v945 = vsub.s32 0, %v944
    %v946 = vrot.slane %v202, %v945
    %vm947 = vcmask 523264
    %v949 = vsel %vm947, %v941, 0
    %v952 = vsel %vm947, %v942, 0
    %954 = vmatprep.subr.mxu0 0.0
    %955 = vmatpush1.msra.mxu0 0.0
    %956 = vmatprep.subr.mxu0 0.0
    %957 = vmatpush1.msra.mxu0 0.0
    %958 = vmatprep.subr.mxu0 0.0
    %959 = vmatpush1.msra.mxu0 0.0
    %960 = vmatprep.subr.mxu0 0.0
    %961 = vmatpush1.msra.mxu0 0.0
    %962 = vmatprep.subr.mxu0 0.0
    %963 = vmatpush1.msra.mxu0 0.0
    %964 = vmatprep.subr.mxu0 0.0
    %965 = vmatpush1.msra.mxu0 0.0
    %966 = vmatprep.subr.mxu0 0.0
    %967 = vmatpush1.msra.mxu0 0.0
    %968 = vmatprep.subr.mxu0 0.0
    %969 = vmatpush1.msra.mxu0 0.0
    %970 = vmatprep.subr.mxu0 0.0
    %971 = vmatpush1.msra.mxu0 %v196
    %972 = vmatprep.subr.mxu0 0.0
    %973 = vmatpush1.msra.mxu0 %v195
    %974 = vmatprep.subr.mxu0 0.0
    %975 = vmatpush1.msra.mxu0 %v194
    %976 = vmatprep.subr.mxu0 0.0
    %977 = vmatpush1.msra.mxu0 %v193
    %978 = vmatprep.subr.mxu0 0.0
    %979 = vmatpush1.msra.mxu0 %v192
    %980 = vmatprep.subr.mxu0 0.0
    %981 = vmatpush1.msra.mxu0 %v191
    %982 = vmatprep.subr.mxu0 0.0
    %983 = vmatpush1.msra.mxu0 %v190
    %984 = vmatprep.subr.mxu0 0.0
    %985 = vmatpush1.msra.mxu0 %v189
    %986 = vmatprep.subr.mxu0 0.0
    %987 = vmatpush2.msra.mxu0 0.0
    %988 = vmatprep.subr.mxu0 0.0
    %989 = vmatpush2.msra.mxu0 0.0
    %990 = vmatprep.subr.mxu0 0.0
    %991 = vmatpush2.msra.mxu0 0.0
    %992 = vmatprep.subr.mxu0 0.0
    %993 = vmatpush2.msra.mxu0 0.0
    %994 = vmatprep.subr.mxu0 0.0
    %995 = vmatpush2.msra.mxu0 0.0
    %996 = vmatprep.subr.mxu0 0.0
    %997 = vmatpush2.msra.mxu0 0.0
    %998 = vmatprep.subr.mxu0 0.0
    %999 = vmatpush2.msra.mxu0 0.0
    %1000 = vmatprep.subr.mxu0 0.0
    %1001 = vmatpush2.msra.mxu0 0.0
    %1002 = vmatprep.subr.mxu0 0.0
    %1003 = vmatpush2.msra.mxu0 0.0
    %1004 = vmatprep.subr.mxu0 0.0
    %1005 = vmatpush2.msra.mxu0 0.0
    %1006 = vmatprep.subr.mxu0 0.0
    %1007 = vmatpush2.msra.mxu0 0.0
    %1008 = vmatprep.subr.mxu0 0.0
    %1009 = vmatpush2.msra.mxu0 0.0
    %1010 = vmatprep.subr.mxu0 0.0
    %1011 = vmatpush2.msra.mxu0 0.0
    %1012 = vmatprep.subr.mxu0 0.0
    %1013 = vmatpush2.msra.mxu0 0.0
    %1014 = vmatprep.subr.mxu0 0.0
    %1015 = vmatpush2.msra.mxu0 0.0
    %1016 = vmatprep.subr.mxu0 0.0
    %1017 = vmatpush2.msra.mxu0 0.0
    %1018 = vmatprep.mubr.f32.mxu0 0.0
    %1019 = vmatmul.mubr.f32.gmra.mxu0 %v949
    %v1020 = vpop.f32.mrf.mxu0
    %v1021 = vadd.f32 %v946, %v1020
    %v1022 = vpop.f32.mrf.mxu0
    %1023 = vmatprep.mubr.f32.mxu0 0.0
    %1024 = vmatmul.mubr.f32.gmra.mxu0 %v952
    %v1025 = vpop.f32.mrf.mxu0
    %v1026 = vadd.f32 %v946, %v1025
    %v1027 = vpop.f32.mrf.mxu0
    %1028 = vdwg.mxu0
    %v1029 = vadd.f32 %v1021, %v846
    %v1030 = vadd.f32 %v1026, %v847
    %v1031 = vsel %vm58, %v1029, 0.0
    %1032 = vadd.xlane.f32.xlu0 %v1031
    %v1033 = vpop.xlane.xlu0 %1032
    %v1034 = vsel %vm58, %v1030, 0.0
    %1035 = vadd.xlane.f32.xlu0 %v1034
    %v1036 = vpop.xlane.xlu0 %1035
    %v1037 = vmul.f32 %v1033, %v148
    %v1038 = vmul.f32 %v1036, %v148
    %v1039 = vsub.f32 %v1029, %v1037
    %v1040 = vsub.f32 %v1030, %v1038
    %v1041 = vmul.f32 %v1039, %v1039
    %v1042 = vmul.f32 %v1040, %v1040
    %v1043 = vsel %vm58, %v1041, 0.0
    %1044 = vadd.xlane.f32.xlu0 %v1043
    %v1045 = vpop.xlane.xlu0 %1044
    %v1046 = vsel %vm58, %v1042, 0.0
    %1047 = vadd.xlane.f32.xlu0 %v1046
    %v1048 = vpop.xlane.xlu0 %1047
    %v1049 = vmul.f32 %v1045, %v148
    %v1050 = vmul.f32 %v1048, %v148
    %v1051 = vadd.f32 %v1049, 1e-12
    %v1052 = vadd.f32 %v1050, 1e-12
    %v1053 = vrsqrt.pop %v1051
    %v1054 = vrsqrt.pop %v1052
    %v1055 = vmul.f32 %v1039, %v1053
    %v1056 = vmul.f32 %v1040, %v1054
    %v1057 = vlaneseq
    %v1058 = vshrl.u32 %v1057, 7
    %v1059 = vsub.s32 0, %v1058
    %v1060 = vrot.slane %v203, %v1059
    %v1061 = vmul.f32 %v1055, %v1060
    %v1062 = vmul.f32 %v1056, %v1060
    %v1063 = vlaneseq
    %v1064 = vshrl.u32 %v1063, 7
    %v1065 = vsub.s32 0, %v1064
    %v1066 = vrot.slane %v204, %v1065
    %v1067 = vadd.f32 %v1061, %v1066
    %v1068 = vadd.f32 %v1062, %v1066
    %s1069 = scalar_lea.vmem %s3, 192
    %v1070 = vld [vmem:[%s1069] sm:$0xff]
    %v1071 = vld [vmem:[%s1069 + $0x8] sm:$0xff]
    %v1072 = vld [vmem:[%s1069 + $0x10] sm:$0xff]
    %v1073 = vld [vmem:[%s1069 + $0x18] sm:$0xff]
    %v1074 = vld [vmem:[%s1069 + $0x20] sm:$0xff]
    %v1075 = vld [vmem:[%s1069 + $0x28] sm:$0xff]
    %v1076 = vld [vmem:[%s1069 + $0x30] sm:$0xff]
    %v1077 = vld [vmem:[%s1069 + $0x38] sm:$0xff]
    %v1078 = vld [vmem:[%s1069 + $0x40] sm:$0xff]
    %v1079 = vld [vmem:[%s1069 + $0x50] sm:$0xff]
    %v1080 = vld [vmem:[%s1069 + $0x60] sm:$0xff]
    %v1081 = vld [vmem:[%s1069 + $0x70] sm:$0xff]
    %v1082 = vld [vmem:[%s1069 + $0x80] sm:$0xff]
    %v1083 = vld [vmem:[%s1069 + $0x90] sm:$0xff]
    %v1084 = vld [vmem:[%s1069 + $0xa0] sm:$0xff]
    %v1085 = vld [vmem:[%s1069 + $0xb0] sm:$0xff]
    %v1086 = vld [vmem:[%s4 + $0xa] sm:$0x1]
    %v1087 = vld [vmem:[%s4 + $0xb] sm:$0x1]
    %v1088 = vld [vmem:[%s4 + $0xc] sm:$0x1]
    %v1089 = vld [vmem:[%s4 + $0xd] sm:$0x1]
    %v1090 = vld [vmem:[%s4 + $0xe] sm:$0x1]
    %v1091 = vld [vmem:[%s4 + $0xf] sm:$0x1]
    %v1092 = vld [vmem:[%s4 + $0x10] sm:$0x1]
    %v1093 = vld [vmem:[%s4 + $0x11] sm:$0x1]
    %v1094 = vlaneseq
    %v1095 = vshrl.u32 %v1094, 7
    %v1096 = vsub.s32 0, %v1095
    %v1097 = vrot.slane %v1086, %v1096
    %v1099 = vsel %vm58, %v1067, 0
    %v1102 = vsel %vm58, %v1068, 0
    %1104 = vmatprep.subr.mxu0 0.0
    %1105 = vmatpush1.msra.mxu0 0.0
    %1106 = vmatprep.subr.mxu0 0.0
    %1107 = vmatpush1.msra.mxu0 0.0
    %1108 = vmatprep.subr.mxu0 0.0
    %1109 = vmatpush1.msra.mxu0 0.0
    %1110 = vmatprep.subr.mxu0 0.0
    %1111 = vmatpush1.msra.mxu0 0.0
    %1112 = vmatprep.subr.mxu0 0.0
    %1113 = vmatpush1.msra.mxu0 0.0
    %1114 = vmatprep.subr.mxu0 0.0
    %1115 = vmatpush1.msra.mxu0 0.0
    %1116 = vmatprep.subr.mxu0 0.0
    %1117 = vmatpush1.msra.mxu0 0.0
    %1118 = vmatprep.subr.mxu0 0.0
    %1119 = vmatpush1.msra.mxu0 0.0
    %1120 = vmatprep.subr.mxu0 0.0
    %1121 = vmatpush1.msra.mxu0 0.0
    %1122 = vmatprep.subr.mxu0 0.0
    %1123 = vmatpush1.msra.mxu0 0.0
    %1124 = vmatprep.subr.mxu0 0.0
    %1125 = vmatpush1.msra.mxu0 0.0
    %1126 = vmatprep.subr.mxu0 0.0
    %1127 = vmatpush1.msra.mxu0 0.0
    %1128 = vmatprep.subr.mxu0 0.0
    %1129 = vmatpush1.msra.mxu0 %v1076
    %1130 = vmatprep.subr.mxu0 0.0
    %1131 = vmatpush1.msra.mxu0 %v1074
    %1132 = vmatprep.subr.mxu0 0.0
    %1133 = vmatpush1.msra.mxu0 %v1072
    %1134 = vmatprep.subr.mxu0 0.0
    %1135 = vmatpush1.msra.mxu0 %v1070
    %1136 = vmatprep.subr.mxu0 0.0
    %1137 = vmatpush2.msra.mxu0 0.0
    %1138 = vmatprep.subr.mxu0 0.0
    %1139 = vmatpush2.msra.mxu0 0.0
    %1140 = vmatprep.subr.mxu0 0.0
    %1141 = vmatpush2.msra.mxu0 0.0
    %1142 = vmatprep.subr.mxu0 0.0
    %1143 = vmatpush2.msra.mxu0 0.0
    %1144 = vmatprep.subr.mxu0 0.0
    %1145 = vmatpush2.msra.mxu0 0.0
    %1146 = vmatprep.subr.mxu0 0.0
    %1147 = vmatpush2.msra.mxu0 0.0
    %1148 = vmatprep.subr.mxu0 0.0
    %1149 = vmatpush2.msra.mxu0 0.0
    %1150 = vmatprep.subr.mxu0 0.0
    %1151 = vmatpush2.msra.mxu0 0.0
    %1152 = vmatprep.subr.mxu0 0.0
    %1153 = vmatpush2.msra.mxu0 0.0
    %1154 = vmatprep.subr.mxu0 0.0
    %1155 = vmatpush2.msra.mxu0 0.0
    %1156 = vmatprep.subr.mxu0 0.0
    %1157 = vmatpush2.msra.mxu0 0.0
    %1158 = vmatprep.subr.mxu0 0.0
    %1159 = vmatpush2.msra.mxu0 0.0
    %1160 = vmatprep.subr.mxu0 0.0
    %1161 = vmatpush2.msra.mxu0 0.0
    %1162 = vmatprep.subr.mxu0 0.0
    %1163 = vmatpush2.msra.mxu0 0.0
    %1164 = vmatprep.subr.mxu0 0.0
    %1165 = vmatpush2.msra.mxu0 0.0
    %1166 = vmatprep.subr.mxu0 0.0
    %1167 = vmatpush2.msra.mxu0 0.0
    %1168 = vmatprep.mubr.f32.mxu0 0.0
    %1169 = vmatmul.mubr.f32.gmra.mxu0 %v1099
    %v1170 = vpop.f32.mrf.mxu0
    %v1171 = vadd.f32 %v1097, %v1170
    %v1172 = vpop.f32.mrf.mxu0
    %1173 = vmatprep.mubr.f32.mxu0 0.0
    %1174 = vmatmul.mubr.f32.gmra.mxu0 %v1102
    %v1175 = vpop.f32.mrf.mxu0
    %v1176 = vadd.f32 %v1097, %v1175
    %v1177 = vpop.f32.mrf.mxu0
    %1178 = vdwg.mxu0
    %1181 = vrot.lane.b32.xlu0 %v1171, 96
    %v1182 = vpop.permute.xlu0 %1181
    %1183 = vrot.lane.b32.xlu0 %v1176, 96
    %v1184 = vpop.permute.xlu0 %1183
    %v1185 = vsel %vm304, %v1171, 0
    %v1187 = vsel %vm304, %v1176, 0
    %v1189 = vsel %vm304, %v1182, 0
    %v1191 = vsel %vm304, %v1184, 0
    %1193 = vmatprep.subr.mxu0 0.0
    %1194 = vmatpush1.xpose.msra.mxu0 0.0
    %1195 = vmatprep.subr.mxu0 0.0
    %1196 = vmatpush1.xpose.msra.mxu0 0.0
    %1197 = vmatprep.subr.mxu0 0.0
    %1198 = vmatpush1.xpose.msra.mxu0 0.0
    %1199 = vmatprep.subr.mxu0 0.0
    %1200 = vmatpush1.xpose.msra.mxu0 0.0
    %1201 = vmatprep.subr.mxu0 0.0
    %1202 = vmatpush1.xpose.msra.mxu0 0.0
    %1203 = vmatprep.subr.mxu0 0.0
    %1204 = vmatpush1.xpose.msra.mxu0 0.0
    %1205 = vmatprep.subr.mxu0 0.0
    %1206 = vmatpush1.xpose.msra.mxu0 0.0
    %1207 = vmatprep.subr.mxu0 0.0
    %1208 = vmatpush1.xpose.msra.mxu0 0.0
    %1209 = vmatprep.subr.mxu0 0.0
    %1210 = vmatpush1.xpose.msra.mxu0 0.0
    %1211 = vmatprep.subr.mxu0 0.0
    %1212 = vmatpush1.xpose.msra.mxu0 0.0
    %1213 = vmatprep.subr.mxu0 0.0
    %1214 = vmatpush1.xpose.msra.mxu0 0.0
    %1215 = vmatprep.subr.mxu0 0.0
    %1216 = vmatpush1.xpose.msra.mxu0 0.0
    %1217 = vmatprep.subr.mxu0 0.0
    %1218 = vmatpush1.xpose.msra.mxu0 0.0
    %1219 = vmatprep.subr.mxu0 0.0
    %1220 = vmatpush1.xpose.msra.mxu0 0.0
    %1221 = vmatprep.subr.mxu0 0.0
    %1222 = vmatpush1.xpose.msra.mxu0 %v1191
    %1223 = vmatprep.subr.mxu0 0.0
    %1224 = vmatpush1.xpose.msra.mxu0 %v1189
    %1225 = vmatprep.subr.mxu0 0.0
    %1226 = vmatpush2.xpose.msra.mxu0 0.0
    %1227 = vmatprep.subr.mxu0 0.0
    %1228 = vmatpush2.xpose.msra.mxu0 0.0
    %1229 = vmatprep.subr.mxu0 0.0
    %1230 = vmatpush2.xpose.msra.mxu0 0.0
    %1231 = vmatprep.subr.mxu0 0.0
    %1232 = vmatpush2.xpose.msra.mxu0 0.0
    %1233 = vmatprep.subr.mxu0 0.0
    %1234 = vmatpush2.xpose.msra.mxu0 0.0
    %1235 = vmatprep.subr.mxu0 0.0
    %1236 = vmatpush2.xpose.msra.mxu0 0.0
    %1237 = vmatprep.subr.mxu0 0.0
    %1238 = vmatpush2.xpose.msra.mxu0 0.0
    %1239 = vmatprep.subr.mxu0 0.0
    %1240 = vmatpush2.xpose.msra.mxu0 0.0
    %1241 = vmatprep.subr.mxu0 0.0
    %1242 = vmatpush2.xpose.msra.mxu0 0.0
    %1243 = vmatprep.subr.mxu0 0.0
    %1244 = vmatpush2.xpose.msra.mxu0 0.0
    %1245 = vmatprep.subr.mxu0 0.0
    %1246 = vmatpush2.xpose.msra.mxu0 0.0
    %1247 = vmatprep.subr.mxu0 0.0
    %1248 = vmatpush2.xpose.msra.mxu0 0.0
    %1249 = vmatprep.subr.mxu0 0.0
    %1250 = vmatpush2.xpose.msra.mxu0 0.0
    %1251 = vmatprep.subr.mxu0 0.0
    %1252 = vmatpush2.xpose.msra.mxu0 0.0
    %1253 = vmatprep.subr.mxu0 0.0
    %1254 = vmatpush2.xpose.msra.mxu0 0.0
    %1255 = vmatprep.subr.mxu0 0.0
    %1256 = vmatpush2.xpose.msra.mxu0 0.0
    %1257 = vmatprep.mubr.f32.mxu0 0.0
    %1258 = vmatmul.mubr.f32.gmra.mxu0 %v1185
    %v1259 = vpop.f32.mrf.mxu0
    %v1260 = vadd.f32 %v299, %v1259
    %v1261 = vpop.f32.mrf.mxu0
    %1262 = vmatprep.mubr.f32.mxu0 0.0
    %1263 = vmatmul.mubr.f32.gmra.mxu0 %v1187
    %v1264 = vpop.f32.mrf.mxu0
    %v1265 = vadd.f32 %v301, %v1264
    %v1266 = vpop.f32.mrf.mxu0
    %1267 = vdwg.mxu0
    %v1268 = vsel %vm304, %v1260, -inf
    %1269 = vmax.xlane.f32.xlu0 %v1268
    %v1270 = vpop.xlane.xlu0 %1269
    %v1271 = vsel %vm304, %v1265, -inf
    %1272 = vmax.xlane.f32.xlu0 %v1271
    %v1273 = vpop.xlane.xlu0 %1272
    %v1274 = vsub.f32 %v1260, %v1270
    %v1275 = vsub.f32 %v1265, %v1273
    %v1276 = vmul.f32 %v1274, 1.442695
    %v1277 = vpow.pop %v1276
    %v1278 = vmul.f32 %v1275, 1.442695
    %v1279 = vpow.pop %v1278
    %v1280 = vsel %vm304, %v1277, 0.0
    %1281 = vadd.xlane.f32.xlu0 %v1280
    %v1282 = vpop.xlane.xlu0 %1281
    %v1283 = vsel %vm304, %v1279, 0.0
    %1284 = vadd.xlane.f32.xlu0 %v1283
    %v1285 = vpop.xlane.xlu0 %1284
    %v1286 = vrcp.pop %v1282
    %v1287 = vrcp.pop %v1285
    %v1288 = vmul.f32 %v1277, %v1286
    %v1289 = vmul.f32 %v1279, %v1287
    %1290 = vrot.lane.b32.xlu0 %v1171, 64
    %v1291 = vpop.permute.xlu0 %1290
    %1292 = vrot.lane.b32.xlu0 %v1176, 64
    %v1293 = vpop.permute.xlu0 %1292
    %v1297 = vsel %vm304, %v1288, 0
    %v1300 = vsel %vm304, %v1289, 0
    %1302 = vmatprep.subr.mxu0 0.0
    %1303 = vmatpush1.msra.mxu0 0.0
    %1304 = vmatprep.subr.mxu0 0.0
    %1305 = vmatpush1.msra.mxu0 0.0
    %1306 = vmatprep.subr.mxu0 0.0
    %1307 = vmatpush1.msra.mxu0 0.0
    %1308 = vmatprep.subr.mxu0 0.0
    %1309 = vmatpush1.msra.mxu0 0.0
    %1310 = vmatprep.subr.mxu0 0.0
    %1311 = vmatpush1.msra.mxu0 0.0
    %1312 = vmatprep.subr.mxu0 0.0
    %1313 = vmatpush1.msra.mxu0 0.0
    %1314 = vmatprep.subr.mxu0 0.0
    %1315 = vmatpush1.msra.mxu0 0.0
    %1316 = vmatprep.subr.mxu0 0.0
    %1317 = vmatpush1.msra.mxu0 0.0
    %1318 = vmatprep.subr.mxu0 0.0
    %1319 = vmatpush1.msra.mxu0 0.0
    %1320 = vmatprep.subr.mxu0 0.0
    %1321 = vmatpush1.msra.mxu0 0.0
    %1322 = vmatprep.subr.mxu0 0.0
    %1323 = vmatpush1.msra.mxu0 0.0
    %1324 = vmatprep.subr.mxu0 0.0
    %1325 = vmatpush1.msra.mxu0 0.0
    %1326 = vmatprep.subr.mxu0 0.0
    %1327 = vmatpush1.msra.mxu0 0.0
    %1328 = vmatprep.subr.mxu0 0.0
    %1329 = vmatpush1.msra.mxu0 0.0
    %1330 = vmatprep.subr.mxu0 0.0
    %1331 = vmatpush1.msra.mxu0 %v1293
    %1332 = vmatprep.subr.mxu0 0.0
    %1333 = vmatpush1.msra.mxu0 %v1291
    %1334 = vmatprep.subr.mxu0 0.0
    %1335 = vmatpush2.msra.mxu0 0.0
    %1336 = vmatprep.subr.mxu0 0.0
    %1337 = vmatpush2.msra.mxu0 0.0
    %1338 = vmatprep.subr.mxu0 0.0
    %1339 = vmatpush2.msra.mxu0 0.0
    %1340 = vmatprep.subr.mxu0 0.0
    %1341 = vmatpush2.msra.mxu0 0.0
    %1342 = vmatprep.subr.mxu0 0.0
    %1343 = vmatpush2.msra.mxu0 0.0
    %1344 = vmatprep.subr.mxu0 0.0
    %1345 = vmatpush2.msra.mxu0 0.0
    %1346 = vmatprep.subr.mxu0 0.0
    %1347 = vmatpush2.msra.mxu0 0.0
    %1348 = vmatprep.subr.mxu0 0.0
    %1349 = vmatpush2.msra.mxu0 0.0
    %1350 = vmatprep.subr.mxu0 0.0
    %1351 = vmatpush2.msra.mxu0 0.0
    %1352 = vmatprep.subr.mxu0 0.0
    %1353 = vmatpush2.msra.mxu0 0.0
    %1354 = vmatprep.subr.mxu0 0.0
    %1355 = vmatpush2.msra.mxu0 0.0
    %1356 = vmatprep.subr.mxu0 0.0
    %1357 = vmatpush2.msra.mxu0 0.0
    %1358 = vmatprep.subr.mxu0 0.0
    %1359 = vmatpush2.msra.mxu0 0.0
    %1360 = vmatprep.subr.mxu0 0.0
    %1361 = vmatpush2.msra.mxu0 0.0
    %1362 = vmatprep.subr.mxu0 0.0
    %1363 = vmatpush2.msra.mxu0 0.0
    %1364 = vmatprep.subr.mxu0 0.0
    %1365 = vmatpush2.msra.mxu0 0.0
    %1366 = vmatprep.mubr.f32.mxu0 0.0
    %1367 = vmatmul.mubr.f32.gmra.mxu0 %v1297
    %v1368 = vpop.f32.mrf.mxu0
    %v1369 = vadd.f32 0.0, %v1368
    %v1370 = vpop.f32.mrf.mxu0
    %1371 = vmatprep.mubr.f32.mxu0 0.0
    %1372 = vmatmul.mubr.f32.gmra.mxu0 %v1300
    %v1373 = vpop.f32.mrf.mxu0
    %v1374 = vadd.f32 0.0, %v1373
    %v1375 = vpop.f32.mrf.mxu0
    %1376 = vdwg.mxu0
    %1377 = vrot.lane.b32.xlu0 %v1171, 112
    %v1378 = vpop.permute.xlu0 %1377
    %1379 = vrot.lane.b32.xlu0 %v1176, 112
    %v1380 = vpop.permute.xlu0 %1379
    %1381 = vrot.lane.b32.xlu0 %v1171, 80
    %v1382 = vpop.permute.xlu0 %1381
    %1383 = vrot.lane.b32.xlu0 %v1176, 80
    %v1384 = vpop.permute.xlu0 %1383
    %v1385 = vsel %vm304, %v1378, 0
    %v1387 = vsel %vm304, %v1380, 0
    %v1389 = vsel %vm304, %v1382, 0
    %v1391 = vsel %vm304, %v1384, 0
    %1393 = vmatprep.subr.mxu0 0.0
    %1394 = vmatpush1.xpose.msra.mxu0 0.0
    %1395 = vmatprep.subr.mxu0 0.0
    %1396 = vmatpush1.xpose.msra.mxu0 0.0
    %1397 = vmatprep.subr.mxu0 0.0
    %1398 = vmatpush1.xpose.msra.mxu0 0.0
    %1399 = vmatprep.subr.mxu0 0.0
    %1400 = vmatpush1.xpose.msra.mxu0 0.0
    %1401 = vmatprep.subr.mxu0 0.0
    %1402 = vmatpush1.xpose.msra.mxu0 0.0
    %1403 = vmatprep.subr.mxu0 0.0
    %1404 = vmatpush1.xpose.msra.mxu0 0.0
    %1405 = vmatprep.subr.mxu0 0.0
    %1406 = vmatpush1.xpose.msra.mxu0 0.0
    %1407 = vmatprep.subr.mxu0 0.0
    %1408 = vmatpush1.xpose.msra.mxu0 0.0
    %1409 = vmatprep.subr.mxu0 0.0
    %1410 = vmatpush1.xpose.msra.mxu0 0.0
    %1411 = vmatprep.subr.mxu0 0.0
    %1412 = vmatpush1.xpose.msra.mxu0 0.0
    %1413 = vmatprep.subr.mxu0 0.0
    %1414 = vmatpush1.xpose.msra.mxu0 0.0
    %1415 = vmatprep.subr.mxu0 0.0
    %1416 = vmatpush1.xpose.msra.mxu0 0.0
    %1417 = vmatprep.subr.mxu0 0.0
    %1418 = vmatpush1.xpose.msra.mxu0 0.0
    %1419 = vmatprep.subr.mxu0 0.0
    %1420 = vmatpush1.xpose.msra.mxu0 0.0
    %1421 = vmatprep.subr.mxu0 0.0
    %1422 = vmatpush1.xpose.msra.mxu0 %v1391
    %1423 = vmatprep.subr.mxu0 0.0
    %1424 = vmatpush1.xpose.msra.mxu0 %v1389
    %1425 = vmatprep.subr.mxu0 0.0
    %1426 = vmatpush2.xpose.msra.mxu0 0.0
    %1427 = vmatprep.subr.mxu0 0.0
    %1428 = vmatpush2.xpose.msra.mxu0 0.0
    %1429 = vmatprep.subr.mxu0 0.0
    %1430 = vmatpush2.xpose.msra.mxu0 0.0
    %1431 = vmatprep.subr.mxu0 0.0
    %1432 = vmatpush2.xpose.msra.mxu0 0.0
    %1433 = vmatprep.subr.mxu0 0.0
    %1434 = vmatpush2.xpose.msra.mxu0 0.0
    %1435 = vmatprep.subr.mxu0 0.0
    %1436 = vmatpush2.xpose.msra.mxu0 0.0
    %1437 = vmatprep.subr.mxu0 0.0
    %1438 = vmatpush2.xpose.msra.mxu0 0.0
    %1439 = vmatprep.subr.mxu0 0.0
    %1440 = vmatpush2.xpose.msra.mxu0 0.0
    %1441 = vmatprep.subr.mxu0 0.0
    %1442 = vmatpush2.xpose.msra.mxu0 0.0
    %1443 = vmatprep.subr.mxu0 0.0
    %1444 = vmatpush2.xpose.msra.mxu0 0.0
    %1445 = vmatprep.subr.mxu0 0.0
    %1446 = vmatpush2.xpose.msra.mxu0 0.0
    %1447 = vmatprep.subr.mxu0 0.0
    %1448 = vmatpush2.xpose.msra.mxu0 0.0
    %1449 = vmatprep.subr.mxu0 0.0
    %1450 = vmatpush2.xpose.msra.mxu0 0.0
    %1451 = vmatprep.subr.mxu0 0.0
    %1452 = vmatpush2.xpose.msra.mxu0 0.0
    %1453 = vmatprep.subr.mxu0 0.0
    %1454 = vmatpush2.xpose.msra.mxu0 0.0
    %1455 = vmatprep.subr.mxu0 0.0
    %1456 = vmatpush2.xpose.msra.mxu0 0.0
    %1457 = vmatprep.mubr.f32.mxu0 0.0
    %1458 = vmatmul.mubr.f32.gmra.mxu0 %v1385
    %v1459 = vpop.f32.mrf.mxu0
    %v1460 = vadd.f32 %v299, %v1459
    %v1461 = vpop.f32.mrf.mxu0
    %1462 = vmatprep.mubr.f32.mxu0 0.0
    %1463 = vmatmul.mubr.f32.gmra.mxu0 %v1387
    %v1464 = vpop.f32.mrf.mxu0
    %v1465 = vadd.f32 %v301, %v1464
    %v1466 = vpop.f32.mrf.mxu0
    %1467 = vdwg.mxu0
    %v1468 = vsel %vm304, %v1460, -inf
    %1469 = vmax.xlane.f32.xlu0 %v1468
    %v1470 = vpop.xlane.xlu0 %1469
    %v1471 = vsel %vm304, %v1465, -inf
    %1472 = vmax.xlane.f32.xlu0 %v1471
    %v1473 = vpop.xlane.xlu0 %1472
    %v1474 = vsub.f32 %v1460, %v1470
    %v1475 = vsub.f32 %v1465, %v1473
    %v1476 = vmul.f32 %v1474, 1.442695
    %v1477 = vpow.pop %v1476
    %v1478 = vmul.f32 %v1475, 1.442695
    %v1479 = vpow.pop %v1478
    %v1480 = vsel %vm304, %v1477, 0.0
    %1481 = vadd.xlane.f32.xlu0 %v1480
    %v1482 = vpop.xlane.xlu0 %1481
    %v1483 = vsel %vm304, %v1479, 0.0
    %1484 = vadd.xlane.f32.xlu0 %v1483
    %v1485 = vpop.xlane.xlu0 %1484
    %v1486 = vrcp.pop %v1482
    %v1487 = vrcp.pop %v1485
    %v1488 = vmul.f32 %v1477, %v1486
    %v1489 = vmul.f32 %v1479, %v1487
    %1490 = vrot.lane.b32.xlu0 %v1171, 48
    %v1491 = vpop.permute.xlu0 %1490
    %1492 = vrot.lane.b32.xlu0 %v1176, 48
    %v1493 = vpop.permute.xlu0 %1492
    %v1497 = vsel %vm304, %v1488, 0
    %v1500 = vsel %vm304, %v1489, 0
    %1502 = vmatprep.subr.mxu0 0.0
    %1503 = vmatpush1.msra.mxu0 0.0
    %1504 = vmatprep.subr.mxu0 0.0
    %1505 = vmatpush1.msra.mxu0 0.0
    %1506 = vmatprep.subr.mxu0 0.0
    %1507 = vmatpush1.msra.mxu0 0.0
    %1508 = vmatprep.subr.mxu0 0.0
    %1509 = vmatpush1.msra.mxu0 0.0
    %1510 = vmatprep.subr.mxu0 0.0
    %1511 = vmatpush1.msra.mxu0 0.0
    %1512 = vmatprep.subr.mxu0 0.0
    %1513 = vmatpush1.msra.mxu0 0.0
    %1514 = vmatprep.subr.mxu0 0.0
    %1515 = vmatpush1.msra.mxu0 0.0
    %1516 = vmatprep.subr.mxu0 0.0
    %1517 = vmatpush1.msra.mxu0 0.0
    %1518 = vmatprep.subr.mxu0 0.0
    %1519 = vmatpush1.msra.mxu0 0.0
    %1520 = vmatprep.subr.mxu0 0.0
    %1521 = vmatpush1.msra.mxu0 0.0
    %1522 = vmatprep.subr.mxu0 0.0
    %1523 = vmatpush1.msra.mxu0 0.0
    %1524 = vmatprep.subr.mxu0 0.0
    %1525 = vmatpush1.msra.mxu0 0.0
    %1526 = vmatprep.subr.mxu0 0.0
    %1527 = vmatpush1.msra.mxu0 0.0
    %1528 = vmatprep.subr.mxu0 0.0
    %1529 = vmatpush1.msra.mxu0 0.0
    %1530 = vmatprep.subr.mxu0 0.0
    %1531 = vmatpush1.msra.mxu0 %v1493
    %1532 = vmatprep.subr.mxu0 0.0
    %1533 = vmatpush1.msra.mxu0 %v1491
    %1534 = vmatprep.subr.mxu0 0.0
    %1535 = vmatpush2.msra.mxu0 0.0
    %1536 = vmatprep.subr.mxu0 0.0
    %1537 = vmatpush2.msra.mxu0 0.0
    %1538 = vmatprep.subr.mxu0 0.0
    %1539 = vmatpush2.msra.mxu0 0.0
    %1540 = vmatprep.subr.mxu0 0.0
    %1541 = vmatpush2.msra.mxu0 0.0
    %1542 = vmatprep.subr.mxu0 0.0
    %1543 = vmatpush2.msra.mxu0 0.0
    %1544 = vmatprep.subr.mxu0 0.0
    %1545 = vmatpush2.msra.mxu0 0.0
    %1546 = vmatprep.subr.mxu0 0.0
    %1547 = vmatpush2.msra.mxu0 0.0
    %1548 = vmatprep.subr.mxu0 0.0
    %1549 = vmatpush2.msra.mxu0 0.0
    %1550 = vmatprep.subr.mxu0 0.0
    %1551 = vmatpush2.msra.mxu0 0.0
    %1552 = vmatprep.subr.mxu0 0.0
    %1553 = vmatpush2.msra.mxu0 0.0
    %1554 = vmatprep.subr.mxu0 0.0
    %1555 = vmatpush2.msra.mxu0 0.0
    %1556 = vmatprep.subr.mxu0 0.0
    %1557 = vmatpush2.msra.mxu0 0.0
    %1558 = vmatprep.subr.mxu0 0.0
    %1559 = vmatpush2.msra.mxu0 0.0
    %1560 = vmatprep.subr.mxu0 0.0
    %1561 = vmatpush2.msra.mxu0 0.0
    %1562 = vmatprep.subr.mxu0 0.0
    %1563 = vmatpush2.msra.mxu0 0.0
    %1564 = vmatprep.subr.mxu0 0.0
    %1565 = vmatpush2.msra.mxu0 0.0
    %1566 = vmatprep.mubr.f32.mxu0 0.0
    %1567 = vmatmul.mubr.f32.gmra.mxu0 %v1497
    %v1568 = vpop.f32.mrf.mxu0
    %v1569 = vadd.f32 0.0, %v1568
    %v1570 = vpop.f32.mrf.mxu0
    %1571 = vmatprep.mubr.f32.mxu0 0.0
    %1572 = vmatmul.mubr.f32.gmra.mxu0 %v1500
    %v1573 = vpop.f32.mrf.mxu0
    %v1574 = vadd.f32 0.0, %v1573
    %v1575 = vpop.f32.mrf.mxu0
    %1576 = vdwg.mxu0
    %1579 = vrot.lane.b32.xlu0 %v1569, 16
    %v1580 = vpop.permute.xlu0 %1579
    %1581 = vrot.lane.b32.xlu0 %v1574, 16
    %v1582 = vpop.permute.xlu0 %1581
    %v1585 = vsel %vm304, %v1369, %v1580
    %v1586 = vsel %vm304, %v1374, %v1582
    %v1587 = vlaneseq
    %v1588 = vshrl.u32 %v1587, 7
    %v1589 = vsub.s32 0, %v1588
    %v1590 = vrot.slane %v1087, %v1589
    %1595 = vrot.lane.b32.xlu0 %v1070, 32
    %v1596 = vpop.permute.xlu0 %1595
    %1597 = vrot.lane.b32.xlu0 %v1072, 32
    %v1598 = vpop.permute.xlu0 %1597
    %1599 = vrot.lane.b32.xlu0 %v1074, 32
    %v1600 = vpop.permute.xlu0 %1599
    %1601 = vrot.lane.b32.xlu0 %v1076, 32
    %v1602 = vpop.permute.xlu0 %1601
    %v1608 = vsel %vm58, %v1585, 0
    %v1611 = vsel %vm58, %v1586, 0
    %1613 = vmatprep.subr.mxu0 0.0
    %1614 = vmatpush1.msra.mxu0 0.0
    %1615 = vmatprep.subr.mxu0 0.0
    %1616 = vmatpush1.msra.mxu0 0.0
    %1617 = vmatprep.subr.mxu0 0.0
    %1618 = vmatpush1.msra.mxu0 0.0
    %1619 = vmatprep.subr.mxu0 0.0
    %1620 = vmatpush1.msra.mxu0 0.0
    %1621 = vmatprep.subr.mxu0 0.0
    %1622 = vmatpush1.msra.mxu0 0.0
    %1623 = vmatprep.subr.mxu0 0.0
    %1624 = vmatpush1.msra.mxu0 0.0
    %1625 = vmatprep.subr.mxu0 0.0
    %1626 = vmatpush1.msra.mxu0 0.0
    %1627 = vmatprep.subr.mxu0 0.0
    %1628 = vmatpush1.msra.mxu0 0.0
    %1629 = vmatprep.subr.mxu0 0.0
    %1630 = vmatpush1.msra.mxu0 0.0
    %1631 = vmatprep.subr.mxu0 0.0
    %1632 = vmatpush1.msra.mxu0 0.0
    %1633 = vmatprep.subr.mxu0 0.0
    %1634 = vmatpush1.msra.mxu0 0.0
    %1635 = vmatprep.subr.mxu0 0.0
    %1636 = vmatpush1.msra.mxu0 0.0
    %1637 = vmatprep.subr.mxu0 0.0
    %1638 = vmatpush1.msra.mxu0 %v1602
    %1639 = vmatprep.subr.mxu0 0.0
    %1640 = vmatpush1.msra.mxu0 %v1600
    %1641 = vmatprep.subr.mxu0 0.0
    %1642 = vmatpush1.msra.mxu0 %v1598
    %1643 = vmatprep.subr.mxu0 0.0
    %1644 = vmatpush1.msra.mxu0 %v1596
    %1645 = vmatprep.subr.mxu0 0.0
    %1646 = vmatpush2.msra.mxu0 0.0
    %1647 = vmatprep.subr.mxu0 0.0
    %1648 = vmatpush2.msra.mxu0 0.0
    %1649 = vmatprep.subr.mxu0 0.0
    %1650 = vmatpush2.msra.mxu0 0.0
    %1651 = vmatprep.subr.mxu0 0.0
    %1652 = vmatpush2.msra.mxu0 0.0
    %1653 = vmatprep.subr.mxu0 0.0
    %1654 = vmatpush2.msra.mxu0 0.0
    %1655 = vmatprep.subr.mxu0 0.0
    %1656 = vmatpush2.msra.mxu0 0.0
    %1657 = vmatprep.subr.mxu0 0.0
    %1658 = vmatpush2.msra.mxu0 0.0
    %1659 = vmatprep.subr.mxu0 0.0
    %1660 = vmatpush2.msra.mxu0 0.0
    %1661 = vmatprep.subr.mxu0 0.0
    %1662 = vmatpush2.msra.mxu0 0.0
    %1663 = vmatprep.subr.mxu0 0.0
    %1664 = vmatpush2.msra.mxu0 0.0
    %1665 = vmatprep.subr.mxu0 0.0
    %1666 = vmatpush2.msra.mxu0 0.0
    %1667 = vmatprep.subr.mxu0 0.0
    %1668 = vmatpush2.msra.mxu0 0.0
    %1669 = vmatprep.subr.mxu0 0.0
    %1670 = vmatpush2.msra.mxu0 0.0
    %1671 = vmatprep.subr.mxu0 0.0
    %1672 = vmatpush2.msra.mxu0 0.0
    %1673 = vmatprep.subr.mxu0 0.0
    %1674 = vmatpush2.msra.mxu0 0.0
    %1675 = vmatprep.subr.mxu0 0.0
    %1676 = vmatpush2.msra.mxu0 0.0
    %1677 = vmatprep.mubr.f32.mxu0 0.0
    %1678 = vmatmul.mubr.f32.gmra.mxu0 %v1608
    %v1679 = vpop.f32.mrf.mxu0
    %v1680 = vadd.f32 %v1590, %v1679
    %v1681 = vpop.f32.mrf.mxu0
    %1682 = vmatprep.mubr.f32.mxu0 0.0
    %1683 = vmatmul.mubr.f32.gmra.mxu0 %v1611
    %v1684 = vpop.f32.mrf.mxu0
    %v1685 = vadd.f32 %v1590, %v1684
    %v1686 = vpop.f32.mrf.mxu0
    %1687 = vdwg.mxu0
    %v1688 = vadd.f32 %v1680, %v1067
    %v1689 = vadd.f32 %v1685, %v1068
    %v1690 = vsel %vm58, %v1688, 0.0
    %1691 = vadd.xlane.f32.xlu0 %v1690
    %v1692 = vpop.xlane.xlu0 %1691
    %v1693 = vsel %vm58, %v1689, 0.0
    %1694 = vadd.xlane.f32.xlu0 %v1693
    %v1695 = vpop.xlane.xlu0 %1694
    %v1696 = vmul.f32 %v1692, %v148
    %v1697 = vmul.f32 %v1695, %v148
    %v1698 = vsub.f32 %v1688, %v1696
    %v1699 = vsub.f32 %v1689, %v1697
    %v1700 = vmul.f32 %v1698, %v1698
    %v1701 = vmul.f32 %v1699, %v1699
    %v1702 = vsel %vm58, %v1700, 0.0
    %1703 = vadd.xlane.f32.xlu0 %v1702
    %v1704 = vpop.xlane.xlu0 %1703
    %v1705 = vsel %vm58, %v1701, 0.0
    %1706 = vadd.xlane.f32.xlu0 %v1705
    %v1707 = vpop.xlane.xlu0 %1706
    %v1708 = vmul.f32 %v1704, %v148
    %v1709 = vmul.f32 %v1707, %v148
    %v1710 = vadd.f32 %v1708, 1e-12
    %v1711 = vadd.f32 %v1709, 1e-12
    %v1712 = vrsqrt.pop %v1710
    %v1713 = vrsqrt.pop %v1711
    %v1714 = vmul.f32 %v1698, %v1712
    %v1715 = vmul.f32 %v1699, %v1713
    %v1716 = vlaneseq
    %v1717 = vshrl.u32 %v1716, 7
    %v1718 = vsub.s32 0, %v1717
    %v1719 = vrot.slane %v1088, %v1718
    %v1720 = vmul.f32 %v1714, %v1719
    %v1721 = vmul.f32 %v1715, %v1719
    %v1722 = vlaneseq
    %v1723 = vshrl.u32 %v1722, 7
    %v1724 = vsub.s32 0, %v1723
    %v1725 = vrot.slane %v1089, %v1724
    %v1726 = vadd.f32 %v1720, %v1725
    %v1727 = vadd.f32 %v1721, %v1725
    %v1728 = vlaneseq
    %v1729 = vshrl.u32 %v1728, 7
    %v1730 = vsub.s32 0, %v1729
    %v1731 = vrot.slane %v1090, %v1730
    %v1733 = vsel %vm58, %v1726, 0
    %v1736 = vsel %vm58, %v1727, 0
    %1738 = vmatprep.subr.mxu0 0.0
    %1739 = vmatpush1.msra.mxu0 0.0
    %1740 = vmatprep.subr.mxu0 0.0
    %1741 = vmatpush1.msra.mxu0 0.0
    %1742 = vmatprep.subr.mxu0 0.0
    %1743 = vmatpush1.msra.mxu0 0.0
    %1744 = vmatprep.subr.mxu0 0.0
    %1745 = vmatpush1.msra.mxu0 0.0
    %1746 = vmatprep.subr.mxu0 0.0
    %1747 = vmatpush1.msra.mxu0 0.0
    %1748 = vmatprep.subr.mxu0 0.0
    %1749 = vmatpush1.msra.mxu0 0.0
    %1750 = vmatprep.subr.mxu0 0.0
    %1751 = vmatpush1.msra.mxu0 0.0
    %1752 = vmatprep.subr.mxu0 0.0
    %1753 = vmatpush1.msra.mxu0 0.0
    %1754 = vmatprep.subr.mxu0 0.0
    %1755 = vmatpush1.msra.mxu0 0.0
    %1756 = vmatprep.subr.mxu0 0.0
    %1757 = vmatpush1.msra.mxu0 0.0
    %1758 = vmatprep.subr.mxu0 0.0
    %1759 = vmatpush1.msra.mxu0 0.0
    %1760 = vmatprep.subr.mxu0 0.0
    %1761 = vmatpush1.msra.mxu0 0.0
    %1762 = vmatprep.subr.mxu0 0.0
    %1763 = vmatpush1.msra.mxu0 %v1077
    %1764 = vmatprep.subr.mxu0 0.0
    %1765 = vmatpush1.msra.mxu0 %v1075
    %1766 = vmatprep.subr.mxu0 0.0
    %1767 = vmatpush1.msra.mxu0 %v1073
    %1768 = vmatprep.subr.mxu0 0.0
    %1769 = vmatpush1.msra.mxu0 %v1071
    %1770 = vmatprep.subr.mxu0 0.0
    %1771 = vmatpush2.msra.mxu0 0.0
    %1772 = vmatprep.subr.mxu0 0.0
    %1773 = vmatpush2.msra.mxu0 0.0
    %1774 = vmatprep.subr.mxu0 0.0
    %1775 = vmatpush2.msra.mxu0 0.0
    %1776 = vmatprep.subr.mxu0 0.0
    %1777 = vmatpush2.msra.mxu0 0.0
    %1778 = vmatprep.subr.mxu0 0.0
    %1779 = vmatpush2.msra.mxu0 0.0
    %1780 = vmatprep.subr.mxu0 0.0
    %1781 = vmatpush2.msra.mxu0 0.0
    %1782 = vmatprep.subr.mxu0 0.0
    %1783 = vmatpush2.msra.mxu0 0.0
    %1784 = vmatprep.subr.mxu0 0.0
    %1785 = vmatpush2.msra.mxu0 0.0
    %1786 = vmatprep.subr.mxu0 0.0
    %1787 = vmatpush2.msra.mxu0 0.0
    %1788 = vmatprep.subr.mxu0 0.0
    %1789 = vmatpush2.msra.mxu0 0.0
    %1790 = vmatprep.subr.mxu0 0.0
    %1791 = vmatpush2.msra.mxu0 0.0
    %1792 = vmatprep.subr.mxu0 0.0
    %1793 = vmatpush2.msra.mxu0 0.0
    %1794 = vmatprep.subr.mxu0 0.0
    %1795 = vmatpush2.msra.mxu0 0.0
    %1796 = vmatprep.subr.mxu0 0.0
    %1797 = vmatpush2.msra.mxu0 0.0
    %1798 = vmatprep.subr.mxu0 0.0
    %1799 = vmatpush2.msra.mxu0 0.0
    %1800 = vmatprep.subr.mxu0 0.0
    %1801 = vmatpush2.msra.mxu0 0.0
    %1802 = vmatprep.mubr.f32.mxu0 0.0
    %1803 = vmatmul.mubr.f32.gmra.mxu0 %v1733
    %v1804 = vpop.f32.mrf.mxu0
    %v1805 = vadd.f32 %v1731, %v1804
    %v1806 = vpop.f32.mrf.mxu0
    %1807 = vmatprep.mubr.f32.mxu0 0.0
    %1808 = vmatmul.mubr.f32.gmra.mxu0 %v1736
    %v1809 = vpop.f32.mrf.mxu0
    %v1810 = vadd.f32 %v1731, %v1809
    %v1811 = vpop.f32.mrf.mxu0
    %1812 = vdwg.mxu0
    %v1813 = vmul.f32 %v1805, 0.5
    %v1814 = vmul.f32 %v1810, 0.5
    %v1815 = vmul.f32 %v1805, 0.70710677
    %v1816 = vmul.f32 %v1810, 0.70710677
    %v1817 = verf.f32.pop %v1815
    %v1818 = verf.f32.pop %v1816
    %v1819 = vadd.f32 %v1817, 1.0
    %v1820 = vadd.f32 %v1818, 1.0
    %v1821 = vmul.f32 %v1813, %v1819
    %v1822 = vmul.f32 %v1814, %v1820
    %v1823 = vlaneseq
    %v1824 = vshrl.u32 %v1823, 7
    %v1825 = vsub.s32 0, %v1824
    %v1826 = vrot.slane %v1091, %v1825
    %v1828 = vsel %vm947, %v1821, 0
    %v1831 = vsel %vm947, %v1822, 0
    %1833 = vmatprep.subr.mxu0 0.0
    %1834 = vmatpush1.msra.mxu0 0.0
    %1835 = vmatprep.subr.mxu0 0.0
    %1836 = vmatpush1.msra.mxu0 0.0
    %1837 = vmatprep.subr.mxu0 0.0
    %1838 = vmatpush1.msra.mxu0 0.0
    %1839 = vmatprep.subr.mxu0 0.0
    %1840 = vmatpush1.msra.mxu0 0.0
    %1841 = vmatprep.subr.mxu0 0.0
    %1842 = vmatpush1.msra.mxu0 0.0
    %1843 = vmatprep.subr.mxu0 0.0
    %1844 = vmatpush1.msra.mxu0 0.0
    %1845 = vmatprep.subr.mxu0 0.0
    %1846 = vmatpush1.msra.mxu0 0.0
    %1847 = vmatprep.subr.mxu0 0.0
    %1848 = vmatpush1.msra.mxu0 0.0
    %1849 = vmatprep.subr.mxu0 0.0
    %1850 = vmatpush1.msra.mxu0 %v1085
    %1851 = vmatprep.subr.mxu0 0.0
    %1852 = vmatpush1.msra.mxu0 %v1084
    %1853 = vmatprep.subr.mxu0 0.0
    %1854 = vmatpush1.msra.mxu0 %v1083
    %1855 = vmatprep.subr.mxu0 0.0
    %1856 = vmatpush1.msra.mxu0 %v1082
    %1857 = vmatprep.subr.mxu0 0.0
    %1858 = vmatpush1.msra.mxu0 %v1081
    %1859 = vmatprep.subr.mxu0 0.0
    %1860 = vmatpush1.msra.mxu0 %v1080
    %1861 = vmatprep.subr.mxu0 0.0
    %1862 = vmatpush1.msra.mxu0 %v1079
    %1863 = vmatprep.subr.mxu0 0.0
    %1864 = vmatpush1.msra.mxu0 %v1078
    %1865 = vmatprep.subr.mxu0 0.0
    %1866 = vmatpush2.msra.mxu0 0.0
    %1867 = vmatprep.subr.mxu0 0.0
    %1868 = vmatpush2.msra.mxu0 0.0
    %1869 = vmatprep.subr.mxu0 0.0
    %1870 = vmatpush2.msra.mxu0 0.0
    %1871 = vmatprep.subr.mxu0 0.0
    %1872 = vmatpush2.msra.mxu0 0.0
    %1873 = vmatprep.subr.mxu0 0.0
    %1874 = vmatpush2.msra.mxu0 0.0
    %1875 = vmatprep.subr.mxu0 0.0
    %1876 = vmatpush2.msra.mxu0 0.0
    %1877 = vmatprep.subr.mxu0 0.0
    %1878 = vmatpush2.msra.mxu0 0.0
    %1879 = vmatprep.subr.mxu0 0.0
    %1880 = vmatpush2.msra.mxu0 0.0
    %1881 = vmatprep.subr.mxu0 0.0
    %1882 = vmatpush2.msra.mxu0 0.0
    %1883 = vmatprep.subr.mxu0 0.0
    %1884 = vmatpush2.msra.mxu0 0.0
    %1885 = vmatprep.subr.mxu0 0.0
    %1886 = vmatpush2.msra.mxu0 0.0
    %1887 = vmatprep.subr.mxu0 0.0
    %1888 = vmatpush2.msra.mxu0 0.0
    %1889 = vmatprep.subr.mxu0 0.0
    %1890 = vmatpush2.msra.mxu0 0.0
    %1891 = vmatprep.subr.mxu0 0.0
    %1892 = vmatpush2.msra.mxu0 0.0
    %1893 = vmatprep.subr.mxu0 0.0
    %1894 = vmatpush2.msra.mxu0 0.0
    %1895 = vmatprep.subr.mxu0 0.0
    %1896 = vmatpush2.msra.mxu0 0.0
    %1897 = vmatprep.mubr.f32.mxu0 0.0
    %1898 = vmatmul.mubr.f32.gmra.mxu0 %v1828
    %v1899 = vpop.f32.mrf.mxu0
    %v1900 = vadd.f32 %v1826, %v1899
    %v1901 = vpop.f32.mrf.mxu0
    %1902 = vmatprep.mubr.f32.mxu0 0.0
    %1903 = vmatmul.mubr.f32.gmra.mxu0 %v1831
    %v1904 = vpop.f32.mrf.mxu0
    %v1905 = vadd.f32 %v1826, %v1904
    %v1906 = vpop.f32.mrf.mxu0
    %1907 = vdwg.mxu0
    %v1908 = vadd.f32 %v1900, %v1726
    %v1909 = vadd.f32 %v1905, %v1727
    %v1910 = vsel %vm58, %v1908, 0.0
    %1911 = vadd.xlane.f32.xlu0 %v1910
    %v1912 = vpop.xlane.xlu0 %1911
    %v1913 = vsel %vm58, %v1909, 0.0
    %1914 = vadd.xlane.f32.xlu0 %v1913
    %v1915 = vpop.xlane.xlu0 %1914
    %v1916 = vmul.f32 %v1912, %v148
    %v1917 = vmul.f32 %v1915, %v148
    %v1918 = vsub.f32 %v1908, %v1916
    %v1919 = vsub.f32 %v1909, %v1917
    %v1920 = vmul.f32 %v1918, %v1918
    %v1921 = vmul.f32 %v1919, %v1919
    %v1922 = vsel %vm58, %v1920, 0.0
    %1923 = vadd.xlane.f32.xlu0 %v1922
    %v1924 = vpop.xlane.xlu0 %1923
    %v1925 = vsel %vm58, %v1921, 0.0
    %1926 = vadd.xlane.f32.xlu0 %v1925
    %v1927 = vpop.xlane.xlu0 %1926
    %v1928 = vmul.f32 %v1924, %v148
    %v1929 = vmul.f32 %v1927, %v148
    %v1930 = vadd.f32 %v1928, 1e-12
    %v1931 = vadd.f32 %v1929, 1e-12
    %v1932 = vrsqrt.pop %v1930
    %v1933 = vrsqrt.pop %v1931
    %v1934 = vmul.f32 %v1918, %v1932
    %v1935 = vmul.f32 %v1919, %v1933
    %v1936 = vlaneseq
    %v1937 = vshrl.u32 %v1936, 7
    %v1938 = vsub.s32 0, %v1937
    %v1939 = vrot.slane %v1092, %v1938
    %v1940 = vmul.f32 %v1934, %v1939
    %v1941 = vmul.f32 %v1935, %v1939
    %v1942 = vlaneseq
    %v1943 = vshrl.u32 %v1942, 7
    %v1944 = vsub.s32 0, %v1943
    %v1945 = vrot.slane %v1093, %v1944
    %v1946 = vadd.f32 %v1940, %v1945
    %v1947 = vadd.f32 %v1941, %v1945
    %v1948 = vld [vmem:[%s4 + $0x12] sm:$0x3]
    %1950 = vset.pattern.permute.xlu0 32
    %1951 = vperm.xlu0 %1950, %v1948
    %v1952 = vpop.permute.xlu0 %1951
    %v1954 = vsel %vm58, %v1948, 0
    %v1957 = vsel %vm58, %v1946, 0
    %v1960 = vsel %vm58, %v1947, 0
    %1962 = vmatprep.subr.mxu0 0.0
    %1963 = vmatpush1.xpose.msra.mxu0 0.0
    %1964 = vmatprep.subr.mxu0 0.0
    %1965 = vmatpush1.xpose.msra.mxu0 0.0
    %1966 = vmatprep.subr.mxu0 0.0
    %1967 = vmatpush1.xpose.msra.mxu0 0.0
    %1968 = vmatprep.subr.mxu0 0.0
    %1969 = vmatpush1.xpose.msra.mxu0 0.0
    %1970 = vmatprep.subr.mxu0 0.0
    %1971 = vmatpush1.xpose.msra.mxu0 0.0
    %1972 = vmatprep.subr.mxu0 0.0
    %1973 = vmatpush1.xpose.msra.mxu0 0.0
    %1974 = vmatprep.subr.mxu0 0.0
    %1975 = vmatpush1.xpose.msra.mxu0 0.0
    %1976 = vmatprep.subr.mxu0 0.0
    %1977 = vmatpush1.xpose.msra.mxu0 0.0
    %1978 = vmatprep.subr.mxu0 0.0
    %1979 = vmatpush1.xpose.msra.mxu0 0.0
    %1980 = vmatprep.subr.mxu0 0.0
    %1981 = vmatpush1.xpose.msra.mxu0 0.0
    %1982 = vmatprep.subr.mxu0 0.0
    %1983 = vmatpush1.xpose.msra.mxu0 0.0
    %1984 = vmatprep.subr.mxu0 0.0
    %1985 = vmatpush1.xpose.msra.mxu0 0.0
    %1986 = vmatprep.subr.mxu0 0.0
    %1987 = vmatpush1.xpose.msra.mxu0 0.0
    %1988 = vmatprep.subr.mxu0 0.0
    %1989 = vmatpush1.xpose.msra.mxu0 0.0
    %1990 = vmatprep.subr.mxu0 0.0
    %1991 = vmatpush1.xpose.msra.mxu0 %v1960
    %1992 = vmatprep.subr.mxu0 0.0
    %1993 = vmatpush1.xpose.msra.mxu0 %v1957
    %1994 = vmatprep.subr.mxu0 0.0
    %1995 = vmatpush2.xpose.msra.mxu0 0.0
    %1996 = vmatprep.subr.mxu0 0.0
    %1997 = vmatpush2.xpose.msra.mxu0 0.0
    %1998 = vmatprep.subr.mxu0 0.0
    %1999 = vmatpush2.xpose.msra.mxu0 0.0
    %2000 = vmatprep.subr.mxu0 0.0
    %2001 = vmatpush2.xpose.msra.mxu0 0.0
    %2002 = vmatprep.subr.mxu0 0.0
    %2003 = vmatpush2.xpose.msra.mxu0 0.0
    %2004 = vmatprep.subr.mxu0 0.0
    %2005 = vmatpush2.xpose.msra.mxu0 0.0
    %2006 = vmatprep.subr.mxu0 0.0
    %2007 = vmatpush2.xpose.msra.mxu0 0.0
    %2008 = vmatprep.subr.mxu0 0.0
    %2009 = vmatpush2.xpose.msra.mxu0 0.0
    %2010 = vmatprep.subr.mxu0 0.0
    %2011 = vmatpush2.xpose.msra.mxu0 0.0
    %2012 = vmatprep.subr.mxu0 0.0
    %2013 = vmatpush2.xpose.msra.mxu0 0.0
    %2014 = vmatprep.subr.mxu0 0.0
    %2015 = vmatpush2.xpose.msra.mxu0 0.0
    %2016 = vmatprep.subr.mxu0 0.0
    %2017 = vmatpush2.xpose.msra.mxu0 0.0
    %2018 = vmatprep.subr.mxu0 0.0
    %2019 = vmatpush2.xpose.msra.mxu0 0.0
    %2020 = vmatprep.subr.mxu0 0.0
    %2021 = vmatpush2.xpose.msra.mxu0 0.0
    %2022 = vmatprep.subr.mxu0 0.0
    %2023 = vmatpush2.xpose.msra.mxu0 0.0
    %2024 = vmatprep.subr.mxu0 0.0
    %2025 = vmatpush2.xpose.msra.mxu0 0.0
    %2026 = vmatprep.mubr.f32.mxu0 0.0
    %2027 = vmatmul.mubr.f32.gmra.mxu0 %v1954
    %v2028 = vpop.f32.mrf.mxu0
    %v2029 = vadd.f32 %v1952, %v2028
    %v2030 = vpop.f32.mrf.mxu0
    %2031 = vdwg.mxu0
    %vm2032 = vcmask 123904
    %2033 = vst.msk [vmem:[%s6] sm:$0x3] %vm2032, %v2029
    %s2034 = sld [smem:[#allocation2]]
    %vm2035 = vcmask 57344
    %v2036 = vsel %vm2035, %v2029, -inf
    %2037 = vmax.xlane.f32.xlu0 %v2036
    %v2038 = vpop.xlane.xlu0 %2037
    %v2039 = vsub.f32 %v2029, %v2038
    %v2040 = vmul.f32 %v2039, 1.442695
    %v2041 = vpow.pop %v2040
    %v2042 = vsel %vm2035, %v2041, 0.0
    %2043 = vadd.xlane.f32.xlu0 %v2042
    %v2044 = vpop.xlane.xlu0 %2043
    %v2045 = vlog2.pop %v2044
    %v2046 = vmul.f32 %v2045, 0.6931472
    %v2047 = vadd.f32 %v2038, %v2046
    %v2048 = vstv %s2034
    %vm2049 = vcmp.eq.s32.totalorder %v39, %v2048
    %v2050 = vsel %vm2049, %v2029, 0.0
    %v2051 = vsel %vm2035, %v2050, 0.0
    %2052 = vadd.xlane.f32.xlu0 %v2051
    %v2053 = vpop.xlane.xlu0 %2052
    %p2054 = scmp.lt.s32.totalorder %s2034, 8
    %s2055 = scalar_select %p2054, 1, 0
    %s2056 = scvt.s32.f32 %s2055
    %v2057 = vsub.f32 %v2047, %v2053
    %v2058 = vstv %s2056
    %v2059 = vmul.f32 %v2057, %v2058
    %s2060 = sld [smem:[#allocation2 + $0x2]]
    %vm2061 = vcmask 58369
    %v2062 = vsel %vm2061, %v2029, -inf
    %2063 = vmax.xlane.f32.xlu0 %v2062
    %v2064 = vpop.xlane.xlu0 %2063
    %v2065 = vsub.f32 %v2029, %v2064
    %v2066 = vmul.f32 %v2065, 1.442695
    %v2067 = vpow.pop %v2066
    %v2068 = vsel %vm2061, %v2067, 0.0
    %2069 = vadd.xlane.f32.xlu0 %v2068
    %v2070 = vpop.xlane.xlu0 %2069
    %v2071 = vlog2.pop %v2070
    %v2072 = vmul.f32 %v2071, 0.6931472
    %v2073 = vadd.f32 %v2064, %v2072
    %v2074 = vstv %s2060
    %vm2075 = vcmp.eq.s32.totalorder %v39, %v2074
    %v2076 = vsel %vm2075, %v2029, 0.0
    %v2077 = vsel %vm2061, %v2076, 0.0
    %2078 = vadd.xlane.f32.xlu0 %v2077
    %v2079 = vpop.xlane.xlu0 %2078
    %p2080 = scmp.lt.s32.totalorder %s2060, 8
    %s2081 = scalar_select %p2080, 1, 0
    %s2082 = scvt.s32.f32 %s2081
    %v2083 = vsub.f32 %v2073, %v2079
    %v2084 = vstv %s2082
    %v2085 = vmul.f32 %v2083, %v2084
    %v2086 = vadd.f32 %v2059, 0.0
    %v2087 = vadd.f32 %v2085, 0.0
    %v2088 = vadd.f32 %v2058, 0.0
    %v2089 = vadd.f32 %v2084, 0.0
    %s2090 = sld [smem:[#allocation2 + $0x1]]
    %vm2091 = vcmask 122944
    %v2092 = vsel %vm2091, %v2029, -inf
    %2093 = vmax.xlane.f32.xlu0 %v2092
    %v2094 = vpop.xlane.xlu0 %2093
    %v2095 = vsub.f32 %v2029, %v2094
    %v2096 = vmul.f32 %v2095, 1.442695
    %v2097 = vpow.pop %v2096
    %2099 = vrot.lane.b32.xlu0 %v2097, 120
    %v2100 = vpop.permute.xlu0 %2099
    %v2102 = vsel %vm2035, %v2100, 0.0
    %2103 = vadd.xlane.f32.xlu0 %v2102
    %v2104 = vpop.xlane.xlu0 %2103
    %v2105 = vlog2.pop %v2104
    %v2106 = vmul.f32 %v2105, 0.6931472
    %v2107 = vadd.f32 %v2094, %v2106
    %v2108 = vstv %s2090
    %vm2109 = vcmp.eq.s32.totalorder %v39, %v2108
    %2111 = vrot.lane.b32.xlu0 %v2029, 120
    %v2112 = vpop.permute.xlu0 %2111
    %v2114 = vsel %vm2109, %v2112, 0.0
    %v2115 = vsel %vm2035, %v2114, 0.0
    %2116 = vadd.xlane.f32.xlu0 %v2115
    %v2117 = vpop.xlane.xlu0 %2116
    %p2118 = scmp.lt.s32.totalorder %s2090, 8
    %s2119 = scalar_select %p2118, 1, 0
    %s2120 = scvt.s32.f32 %s2119
    %v2121 = vsub.f32 %v2107, %v2117
    %v2122 = vstv %s2120
    %v2123 = vmul.f32 %v2121, %v2122
    %s2124 = sld [smem:[#allocation2 + $0x3]]
    %vm2125 = vcmask 123969
    %v2126 = vsel %vm2125, %v2029, -inf
    %2127 = vmax.xlane.f32.xlu0 %v2126
    %v2128 = vpop.xlane.xlu0 %2127
    %v2129 = vsub.f32 %v2029, %v2128
    %v2130 = vmul.f32 %v2129, 1.442695
    %v2131 = vpow.pop %v2130
    %2133 = vrot.lane.b32.xlu0 %v2131, 120
    %v2134 = vpop.permute.xlu0 %2133
    %v2136 = vsel %vm2061, %v2134, 0.0
    %2137 = vadd.xlane.f32.xlu0 %v2136
    %v2138 = vpop.xlane.xlu0 %2137
    %v2139 = vlog2.pop %v2138
    %v2140 = vmul.f32 %v2139, 0.6931472
    %v2141 = vadd.f32 %v2128, %v2140
    %v2142 = vstv %s2124
    %vm2143 = vcmp.eq.s32.totalorder %v39, %v2142
    %v2144 = vrot.slane %v2029, 1
    %2145 = vrot.lane.b32.xlu0 %v2144, 120
    %v2146 = vpop.permute.xlu0 %2145
    %v2148 = vsel %vm2143, %v2146, 0.0
    %v2149 = vsel %vm2035, %v2148, 0.0
    %2150 = vadd.xlane.f32.xlu0 %v2149
    %v2151 = vpop.xlane.xlu0 %2150
    %p2152 = scmp.lt.s32.totalorder %s2124, 8
    %s2153 = scalar_select %p2152, 1, 0
    %s2154 = scvt.s32.f32 %s2153
    %v2156 = vrot.slane %v2151, 7
    %v2158 = vsub.f32 %v2141, %v2156
    %v2159 = vstv %s2154
    %v2160 = vmul.f32 %v2158, %v2159
    %v2161 = vadd.f32 %v2086, %v2123
    %v2162 = vadd.f32 %v2087, %v2160
    %v2163 = vadd.f32 %v2088, %v2122
    %v2164 = vadd.f32 %v2089, %v2159
    %v2165 = vmax.f32 %v2163, 1.0
    %v2166 = vrcp.pop %v2165
    %v2167 = vmul.f32 %v2161, %v2166
    %v2168 = vmax.f32 %v2164, 1.0
    %v2169 = vrcp.pop %v2168
    %v2170 = vmul.f32 %v2162, %v2169
    %v2172 = vrot.slane %v2170, 1
    %v2174 = vadd.f32 %v2167, %v2172
    %v2175 = vmul.f32 %v2174, 0.5
    %vm2176 = vcmask 0
    %2177 = vst.msk [vmem:[#allocation5] sm:$0x1] %vm2176, %v2175
    // Predicated region
    $region26: #{seq_supervised_forward.1} parent=1 // pred_check
      _
    $region27: #{seq_supervised_forward.1} parent=1 // pred_check_branch
      %2179 = sbr.rel (0) target = $region29
    $region28: #{seq_supervised_forward.1} parent=1 // pred_region
      %s2181 = ssub.s32 16, 16
      %2182 = vsyncadd [#allocation3], %s2181
      %s2184 = sshll.u32 [#allocation5], 4
      %s2185 = int_to_ptr.vmem [resolvable:$true] %s2184
      %2187 = dma.vmem_to_hbm [thread:$0]  %s2185, 16, %s5, [#allocation3]
    $region29: #{seq_supervised_forward.1} parent=1 // pred_fallthru
      _
    // Predicated region
    $region30: #{seq_supervised_forward.1} parent=1 // pred_check
      _
    $region31: #{seq_supervised_forward.1} parent=1 // pred_check_branch
      %2189 = sbr.rel (0) target = $region33
    $region32: #{seq_supervised_forward.1} parent=1 // pred_region
      _
    $region33: #{seq_supervised_forward.1} parent=1 // pred_fallthru
      _
    // Predicated region
    $region34: #{seq_supervised_forward.1} parent=1 // pred_check
      _
    $region35: #{seq_supervised_forward.1} parent=1 // pred_check_branch
      %2191 = sbr.rel (0) target = $region37
    $region36: #{seq_supervised_forward.1} parent=1 // pred_region
      %2192 = dma.done [#allocation3], 16
    $region37: #{seq_supervised_forward.1} parent=1 // pred_fallthru
      _
    // Predicated region
    $region38: #{seq_supervised_forward.1} parent=1 // pred_check
      _
    $region39: #{seq_supervised_forward.1} parent=1 // pred_check_branch
      %2194 = sbr.rel (0) target = $region41
    $region40: #{seq_supervised_forward.1} parent=1 // pred_region
      _
    $region41: #{seq_supervised_forward.1} parent=1 // pred_fallthru
      _
    %2195 = vsyncpa [#allocation3], 1
    %2196 = vsyncpa [#allocation4], 1

</llo_original>
